<compile_context>
chip_gen: v7x
topology: tpu7x:2x2x1
jax: 0.10.0
libtpu: 0.0.40
codegen_flags: <defaults>
</compile_context>

<pallas_src>
import jax
import jax.numpy as jnp
from jax.experimental import pallas as pl
from jax.experimental.pallas import tpu as pltpu

D_IN = 4096
H = 100
H_PAD = 128
OUT = 3
OUT_PAD = 128
BN_EPS = 1e-5
ROW_TILE = 16            # sublane multiple that is safe for bf16 and f32


def netd_da_kernel(x_ref, w1_ref, w2_ref, w3_ref, t_ref, o_ref):
    # x:  [TILE_N, 4096] f32 (cast to bf16 in-kernel)
    # w1: [4096, 128]    bf16 (BN1 scale folded into columns)
    # w2: [128, 128]     bf16 (BN2 scale folded into columns)
    # w3: [128, 128]     bf16
    # t:  [8, 128]       f32  row0 = BN1 shift, row1 = BN2 shift, row2 = fc3 bias
    x = x_ref[...].astype(jnp.bfloat16)
    t = t_ref[...]
    # fc1 + folded BN1 + ReLU (dropout == identity in eval mode)
    h1 = jnp.dot(x, w1_ref[...], preferred_element_type=jnp.float32)
    h1 = jnp.maximum(h1 + t[0:1, :], 0.0)
    # fc2 + folded BN2 + ReLU
    h2 = jnp.dot(h1.astype(jnp.bfloat16), w2_ref[...],
                 preferred_element_type=jnp.float32)
    h2 = jnp.maximum(h2 + t[1:2, :], 0.0)
    # fc3 (+ bias), stored lane-dense in bf16
    o = jnp.dot(h2.astype(jnp.bfloat16), w3_ref[...],
                preferred_element_type=jnp.float32) + t[2:3, :]
    o_ref[...] = o.astype(o_ref.dtype)


def _pad_cols(a, n):
    return jnp.pad(a, ((0, 0), (0, n - a.shape[1])))


def _pad_rows(a, n):
    return jnp.pad(a, ((0, n - a.shape[0]), (0, 0)))


def _round_up(n, m):
    return ((n + m - 1) // m) * m


def init_params(key):
    ks = jax.random.split(key, 8)
    p = {}
    # nn.Linear weights are [out, in]; biases [out].
    p["w1"] = jax.random.normal(ks[0], (H, D_IN), jnp.float32) * 0.02
    p["b1"] = jax.random.normal(ks[1], (H,), jnp.float32) * 0.02
    p["w2"] = jax.random.normal(ks[2], (H, H), jnp.float32) * 0.02
    p["b2"] = jax.random.normal(ks[3], (H,), jnp.float32) * 0.02
    p["w3"] = jax.random.normal(ks[4], (OUT, H), jnp.float32) * 0.02
    p["b3"] = jax.random.normal(ks[5], (OUT,), jnp.float32) * 0.02
    # BatchNorm1d(100): gamma, beta, running_mean, running_var
    p["g1"] = 1.0 + 0.1 * jax.random.normal(ks[6], (H,), jnp.float32)
    p["be1"] = jnp.zeros((H,), jnp.float32) + 0.05
    p["m1"] = jnp.zeros((H,), jnp.float32)
    p["v1"] = jnp.ones((H,), jnp.float32)
    p["g2"] = 1.0 + 0.1 * jax.random.normal(ks[7], (H,), jnp.float32)
    p["be2"] = jnp.zeros((H,), jnp.float32) - 0.05
    p["m2"] = jnp.zeros((H,), jnp.float32)
    p["v2"] = jnp.ones((H,), jnp.float32)
    return p


def prepare_kernel_params(p):
    """Weight prep (call ONCE at model load, not per forward).

    Folds linear bias + BN (eval) into per-feature scale/shift:
        y = (x@W^T + b - mean) * gamma / sqrt(var+eps) + beta
          = (x@W^T) * scale + shift
    and folds the scale into the weight columns: x@(W^T * scale) + shift.
    Zero-padded columns/rows keep padded lanes at exactly 0 through ReLU & fc3.
    TODO(synk): for small-batch serving, w1 could additionally be quantized to
    int8 (v5e/v6e) or fp8 (v7x) with the dequant scale folded here.
    """
    def fold(b, g, beta, mean, var):
        scale = g / jnp.sqrt(var + BN_EPS)
        shift = (b - mean) * scale + beta
        return scale, shift

    s1, t1 = fold(p["b1"], p["g1"], p["be1"], p["m1"], p["v1"])
    s2, t2 = fold(p["b2"], p["g2"], p["be2"], p["m2"], p["v2"])

    w1 = p["w1"].T * s1[None, :]                              # [4096, 100]
    w2 = p["w2"].T * s2[None, :]                              # [100, 100]
    w3 = p["w3"].T                                            # [100, 3]

    w1 = _pad_cols(w1, H_PAD).astype(jnp.bfloat16)            # [4096, 128] bf16
    w2 = _pad_cols(_pad_rows(w2, H_PAD), H_PAD).astype(jnp.bfloat16)
    w3 = _pad_cols(_pad_rows(w3, H_PAD), OUT_PAD).astype(jnp.bfloat16)

    # Pack the three small per-feature vectors into one (8, 128) operand.
    tpack = jnp.zeros((8, H_PAD), jnp.float32)
    tpack = tpack.at[0, :H].set(t1)
    tpack = tpack.at[1, :H].set(t2)
    tpack = tpack.at[2, :OUT].set(p["b3"])
    return w1, w2, w3, tpack


def _choose_tile(n_pad, tile_n):
    """Pick a row tile: big enough to amortize per-step pipeline overhead,
    but with >=2 grid steps for moderately large batches so both v7x
    TensorCores get work under dimension_semantics=("parallel",)."""
    if n_pad > tile_n:
        return tile_n
    if n_pad >= 256:
        # Split a single-tile batch in two so megacore has 2 grid steps.
        return _round_up((n_pad + 1) // 2, ROW_TILE)
    return n_pad


def netd_da_forward(x, prepared, tile_n=512):
    """x: [n, 4096] f32 features; prepared: output of prepare_kernel_params."""
    w1, w2, w3, tpack = prepared
    n = x.shape[0]

    # Only pad the batch to the 16-row sublane multiple (cheap / usually a
    # no-op); the ragged last grid block is handled by Pallas OOB semantics.
    n_pad = _round_up(n, ROW_TILE)
    if n_pad != n:
        x = jnp.pad(x, ((0, n_pad - n), (0, 0)))

    tile = _choose_tile(n_pad, tile_n)
    grid = (pl.cdiv(n_pad, tile),)
    const = lambda shape: pl.BlockSpec(shape, lambda i: (0, 0))

    out_padded = pl.pallas_call(
        netd_da_kernel,
        out_shape=jax.ShapeDtypeStruct((n_pad, OUT_PAD), jnp.bfloat16),
        grid_spec=pltpu.PrefetchScalarGridSpec(
            num_scalar_prefetch=0,
            grid=grid,
            in_specs=[
                pl.BlockSpec((tile, D_IN), lambda i: (i, 0)),  # x streams per tile
                const((D_IN, H_PAD)),                          # weights stay resident
                const((H_PAD, H_PAD)),
                const((H_PAD, OUT_PAD)),
                const((8, H_PAD)),
            ],
            out_specs=pl.BlockSpec((tile, OUT_PAD), lambda i: (i, 0)),
        ),
        compiler_params=pltpu.CompilerParams(
            dimension_semantics=("parallel",),
            vmem_limit_bytes=32 * 1024 * 1024),
    )(x, w1, w2, w3, tpack)
    return out_padded[:n, :OUT].astype(jnp.float32)


def reference_forward(x, p):
    def bn(h, g, beta, mean, var):
        return (h - mean) / jnp.sqrt(var + BN_EPS) * g + beta

    h = jnp.maximum(bn(x @ p["w1"].T + p["b1"], p["g1"], p["be1"], p["m1"], p["v1"]), 0.0)
    h = jnp.maximum(bn(h @ p["w2"].T + p["b2"], p["g2"], p["be2"], p["m2"], p["v2"]), 0.0)
    return h @ p["w3"].T + p["b3"]


if __name__ == "__main__":
    key = jax.random.PRNGKey(0)
    kp, kx = jax.random.split(key)
    params = init_params(kp)

    # Weight prep happens once, outside the forward path.
    prepared = jax.tree_util.tree_map(jax.block_until_ready,
                                      prepare_kernel_params(params))

    # netD_da consumes flattened 4096-dim features (e.g. pooled fc7 features).
    x = jax.random.normal(kx, (8, D_IN), jnp.float32)

    out = jax.block_until_ready(netd_da_forward(x, prepared))
    ref = reference_forward(x, params)
    assert out.shape == (8, OUT)
    # bf16 activations/weights on the matmul path (f32 accumulation) and bf16
    # logits writeback -> loosened tolerance vs the f32 reference.
    assert jnp.allclose(out, ref, atol=2e-2, rtol=2e-2), (
        float(jnp.max(jnp.abs(out - ref))))
    print("KERNEL_OK")
</pallas_src>

<mosaic_0001>
module attributes {stable_mosaic.version = 11 : i64} {
  func.func @netd_da_kernel(%arg0: i32, %arg1: memref<16x4096xf32, #tpu.memory_space<vmem>>, %arg2: memref<4096x128xbf16, #tpu.memory_space<vmem>>, %arg3: memref<128x128xbf16, #tpu.memory_space<vmem>>, %arg4: memref<128x128xbf16, #tpu.memory_space<vmem>>, %arg5: memref<8x128xf32, #tpu.memory_space<vmem>>, %arg6: memref<16x128xbf16, #tpu.memory_space<vmem>>) attributes {dimension_semantics = [#tpu.dimension_semantics<parallel>], iteration_bounds = array<i64: 1>, scalar_prefetch = 0 : i64, scratch_operands = 0 : i64, tpu.core_type = #tpu.core_type<tc>, window_params = [{transform_indices = @transform_0, window_bounds = array<i64: 16, 4096>}, {pipeline_mode = #tpu.pipeline_mode<synchronous>, transform_indices = @transform_1, window_bounds = array<i64: 4096, 128>}, {pipeline_mode = #tpu.pipeline_mode<synchronous>, transform_indices = @transform_2, window_bounds = array<i64: 128, 128>}, {pipeline_mode = #tpu.pipeline_mode<synchronous>, transform_indices = @transform_3, window_bounds = array<i64: 128, 128>}, {pipeline_mode = #tpu.pipeline_mode<synchronous>, transform_indices = @transform_4, window_bounds = array<i64: 8, 128>}, {transform_indices = @transform_5, window_bounds = array<i64: 16, 128>}]} {
    %c0 = arith.constant 0 : index
    %c0_0 = arith.constant 0 : index
    %0 = vector.load %arg1[%c0, %c0_0] : memref<16x4096xf32, #tpu.memory_space<vmem>>, vector<16x4096xf32>
    %1 = arith.truncf %0 : vector<16x4096xf32> to vector<16x4096xbf16>
    %c0_1 = arith.constant 0 : index
    %c0_2 = arith.constant 0 : index
    %2 = vector.load %arg5[%c0_1, %c0_2] : memref<8x128xf32, #tpu.memory_space<vmem>>, vector<8x128xf32>
    %c0_3 = arith.constant 0 : index
    %c0_4 = arith.constant 0 : index
    %3 = vector.load %arg2[%c0_3, %c0_4] : memref<4096x128xbf16, #tpu.memory_space<vmem>>, vector<4096x128xbf16>
    %cst = arith.constant dense<0.000000e+00> : vector<16x128xf32>
    %4 = tpu.matmul %1, %3, %cst {dimension_numbers = #tpu.dot_dimension_numbers<[1], [0], [0], [1], [0, 0, 1, 1], [], []>} : vector<16x4096xbf16>, vector<4096x128xbf16>, vector<16x128xf32> -> vector<16x128xf32>
    %5 = vector.extract_strided_slice %2 {offsets = [0, 0], sizes = [1, 128], strides = [1, 1]} : vector<8x128xf32> to vector<1x128xf32>
    %6 = vector.broadcast %5 : vector<1x128xf32> to vector<16x128xf32>
    %7 = arith.addf %4, %6 : vector<16x128xf32>
    %cst_5 = arith.constant 0.000000e+00 : f32
    %8 = vector.broadcast %cst_5 : f32 to vector<16x128xf32>
    %9 = arith.maximumf %7, %8 : vector<16x128xf32>
    %10 = arith.truncf %9 : vector<16x128xf32> to vector<16x128xbf16>
    %c0_6 = arith.constant 0 : index
    %c0_7 = arith.constant 0 : index
    %11 = vector.load %arg3[%c0_6, %c0_7] : memref<128x128xbf16, #tpu.memory_space<vmem>>, vector<128x128xbf16>
    %cst_8 = arith.constant dense<0.000000e+00> : vector<16x128xf32>
    %12 = tpu.matmul %10, %11, %cst_8 {dimension_numbers = #tpu.dot_dimension_numbers<[1], [0], [0], [1], [0, 0, 1, 1], [], []>} : vector<16x128xbf16>, vector<128x128xbf16>, vector<16x128xf32> -> vector<16x128xf32>
    %13 = vector.extract_strided_slice %2 {offsets = [1, 0], sizes = [1, 128], strides = [1, 1]} : vector<8x128xf32> to vector<1x128xf32>
    %14 = vector.broadcast %13 : vector<1x128xf32> to vector<16x128xf32>
    %15 = arith.addf %12, %14 : vector<16x128xf32>
    %cst_9 = arith.constant 0.000000e+00 : f32
    %16 = vector.broadcast %cst_9 : f32 to vector<16x128xf32>
    %17 = arith.maximumf %15, %16 : vector<16x128xf32>
    %18 = arith.truncf %17 : vector<16x128xf32> to vector<16x128xbf16>
    %c0_10 = arith.constant 0 : index
    %c0_11 = arith.constant 0 : index
    %19 = vector.load %arg4[%c0_10, %c0_11] : memref<128x128xbf16, #tpu.memory_space<vmem>>, vector<128x128xbf16>
    %cst_12 = arith.constant dense<0.000000e+00> : vector<16x128xf32>
    %20 = tpu.matmul %18, %19, %cst_12 {dimension_numbers = #tpu.dot_dimension_numbers<[1], [0], [0], [1], [0, 0, 1, 1], [], []>} : vector<16x128xbf16>, vector<128x128xbf16>, vector<16x128xf32> -> vector<16x128xf32>
    %21 = vector.extract_strided_slice %2 {offsets = [2, 0], sizes = [1, 128], strides = [1, 1]} : vector<8x128xf32> to vector<1x128xf32>
    %22 = vector.broadcast %21 : vector<1x128xf32> to vector<16x128xf32>
    %23 = arith.addf %20, %22 : vector<16x128xf32>
    %24 = arith.truncf %23 : vector<16x128xf32> to vector<16x128xbf16>
    %c0_13 = arith.constant 0 : index
    %c0_14 = arith.constant 0 : index
    %25 = vector.load %arg6[%c0_13, %c0_14] : memref<16x128xbf16, #tpu.memory_space<vmem>>, vector<16x128xbf16>
    tpu.vector_store %arg6[%c0_13, %c0_14], %24 {strides = array<i32>} : memref<16x128xbf16, #tpu.memory_space<vmem>>, vector<16x128xbf16>,
    return
  }
  func.func @transform_0(%arg0: i32) -> (i32, i32) {
    %c0_i32 = arith.constant 0 : i32
    %c0_i32_0 = arith.constant 0 : i32
    return %arg0, %c0_i32 : i32, i32
  }
  func.func @transform_1(%arg0: i32) -> (i32, i32) {
    %c0_i32 = arith.constant 0 : i32
    %c0_i32_0 = arith.constant 0 : i32
    %c0_i32_1 = arith.constant 0 : i32
    return %c0_i32, %c0_i32_0 : i32, i32
  }
  func.func @transform_2(%arg0: i32) -> (i32, i32) {
    %c0_i32 = arith.constant 0 : i32
    %c0_i32_0 = arith.constant 0 : i32
    %c0_i32_1 = arith.constant 0 : i32
    return %c0_i32, %c0_i32_0 : i32, i32
  }
  func.func @transform_3(%arg0: i32) -> (i32, i32) {
    %c0_i32 = arith.constant 0 : i32
    %c0_i32_0 = arith.constant 0 : i32
    %c0_i32_1 = arith.constant 0 : i32
    return %c0_i32, %c0_i32_0 : i32, i32
  }
  func.func @transform_4(%arg0: i32) -> (i32, i32) {
    %c0_i32 = arith.constant 0 : i32
    %c0_i32_0 = arith.constant 0 : i32
    %c0_i32_1 = arith.constant 0 : i32
    return %c0_i32, %c0_i32_0 : i32, i32
  }
  func.func @transform_5(%arg0: i32) -> (i32, i32) {
    %c0_i32 = arith.constant 0 : i32
    %c0_i32_0 = arith.constant 0 : i32
    return %arg0, %c0_i32 : i32, i32
  }
}

</mosaic_0001>

<llo_original>
// kernel: tpu_custom_call.1
$region0: #{tpu_custom_call.1}
  #allocation0 [shape = 'u32[]', space=smem, size = 0x4, offset = 0x4, fixed_abs, tag = 'smem constant byte address 0x4 - core index']
  #allocation1 [shape = 'u32[144,128]{1,0:T(1,128)}', space=vmem, size = 0x12000, scoped, tag = 'internal scratch']
  %s0 = inlined_call_operand.hbm [shape: f32[16,4096], index: 0, kind: input, shape index: {}]
  %s1 = inlined_call_operand.hbm [shape: bf16[4096,128], index: 1, kind: input, shape index: {}]
  %s2 = inlined_call_operand.hbm [shape: bf16[128,128], index: 2, kind: input, shape index: {}]
  %s3 = inlined_call_operand.hbm [shape: bf16[128,128], index: 3, kind: input, shape index: {}]
  %s4 = inlined_call_operand.vmem [shape: f32[8,128], index: 4, kind: input, shape index: {}]
  %s5 = inlined_call_operand.hbm [shape: bf16[16,128], index: 5, kind: output, shape index: {}]
  %s6 = sld [smem:[#allocation0]]
  $region46: #{tpu_custom_call.1} parent=0
    _
  %s8 = ssub.s32 1, %s6
  %s9 = scalar_select 0, %s8, %s6
  $region1: #{tpu_custom_call.1} parent=0
    #allocation2 [shape = 'u8[262144]{0}', space=vmem, size = 0x40000, scoped, tag = 'input window, operand 0, single buffered']
    #allocation3 [shape = 's32[1]{0}', space=sflag, size = 0x4, scoped, tag = 'scoped memory for tpu_custom_call.1']
    #allocation4 [shape = 's32[1]{0}', space=sflag, size = 0x4, scoped, tag = 'scoped memory for tpu_custom_call.1']
    #allocation5 [shape = 'u8[1048576]{0}', space=vmem, size = 0x100000, scoped, tag = 'input window, operand 1, single buffered']
    #allocation6 [shape = 's32[1]{0}', space=sflag, size = 0x4, scoped, tag = 'scoped memory for tpu_custom_call.1']
    #allocation7 [shape = 'u8[32768]{0}', space=vmem, size = 0x8000, scoped, tag = 'input window, operand 2, single buffered']
    #allocation8 [shape = 'u8[32768]{0}', space=vmem, size = 0x8000, scoped, tag = 'input window, operand 3, single buffered']
    #allocation9 [shape = 's32[1]{0}', space=sflag, size = 0x4, scoped, tag = 'scoped memory for tpu_custom_call.1']
    #allocation10 [shape = 'u8[4096]{0}', space=vmem, size = 0x1000, scoped, tag = 'output window, operand 0, single buffered']
    %10 = vsyncpa [#allocation3], 0
    %11 = vsyncpa [#allocation6], 0
    %12 = vsyncpa [#allocation9], 0
    %13 = vsyncpa [#allocation4], 0
    // Predicated region
    $region2: #{tpu_custom_call.1} parent=1 // pred_check
      _
    $region3: #{tpu_custom_call.1} parent=1 // pred_check_branch
      %15 = sbr.rel (0) target = $region5
    $region4: #{tpu_custom_call.1} parent=1 // pred_region
      %s17 = ssub.s32 8192, 8192
      %18 = vsyncadd [#allocation3], %s17
      %s19 = sshll.u32 [#allocation2], 4
      %s20 = int_to_ptr.vmem [resolvable:$true] %s19
      %25 = dma.hbm_to_vmem [thread:$0]  %s0, 8192, %s20, [#allocation3], 4096, 4096, 256
    $region5: #{tpu_custom_call.1} parent=1 // pred_fallthru
      _
    // Predicated region
    $region6: #{tpu_custom_call.1} parent=1 // pred_check
      _
    $region7: #{tpu_custom_call.1} parent=1 // pred_check_branch
      %27 = sbr.rel (0) target = $region9
    $region8: #{tpu_custom_call.1} parent=1 // pred_region
      %s29 = ssub.s32 32768, 32768
      %30 = vsyncadd [#allocation6], %s29
      %s31 = sshll.u32 [#allocation5], 4
      %s32 = int_to_ptr.vmem [resolvable:$true] %s31
      %37 = dma.hbm_to_vmem [thread:$0]  %s1, 32768, %s32, [#allocation6], 64, 64, 4
    $region9: #{tpu_custom_call.1} parent=1 // pred_fallthru
      _
    // Predicated region
    $region10: #{tpu_custom_call.1} parent=1 // pred_check
      _
    $region11: #{tpu_custom_call.1} parent=1 // pred_check_branch
      %39 = sbr.rel (0) target = $region13
    $region12: #{tpu_custom_call.1} parent=1 // pred_region
      %s41 = ssub.s32 1024, 1024
      %42 = vsyncadd [#allocation6], %s41
      %s43 = sshll.u32 [#allocation7], 4
      %s44 = int_to_ptr.vmem [resolvable:$true] %s43
      %49 = dma.hbm_to_vmem [thread:$0]  %s2, 1024, %s44, [#allocation6], 64, 64, 4
    $region13: #{tpu_custom_call.1} parent=1 // pred_fallthru
      _
    // Predicated region
    $region14: #{tpu_custom_call.1} parent=1 // pred_check
      _
    $region15: #{tpu_custom_call.1} parent=1 // pred_check_branch
      %51 = sbr.rel (0) target = $region17
    $region16: #{tpu_custom_call.1} parent=1 // pred_region
      %s53 = ssub.s32 1024, 1024
      %54 = vsyncadd [#allocation9], %s53
      %s55 = sshll.u32 [#allocation8], 4
      %s56 = int_to_ptr.vmem [resolvable:$true] %s55
      %61 = dma.hbm_to_vmem [thread:$0]  %s3, 1024, %s56, [#allocation9], 64, 64, 4
    $region17: #{tpu_custom_call.1} parent=1 // pred_fallthru
      _
    // Predicated region
    $region18: #{tpu_custom_call.1} parent=1 // pred_check
      _
    $region19: #{tpu_custom_call.1} parent=1 // pred_check_branch
      %63 = sbr.rel (0) target = $region21
    $region20: #{tpu_custom_call.1} parent=1 // pred_region
      _
    $region21: #{tpu_custom_call.1} parent=1 // pred_fallthru
      _
    // Predicated region
    $region22: #{tpu_custom_call.1} parent=1 // pred_check
      _
    $region23: #{tpu_custom_call.1} parent=1 // pred_check_branch
      %65 = sbr.rel (0) target = $region25
    $region24: #{tpu_custom_call.1} parent=1 // pred_region
      %66 = dma.done [#allocation3], 8192
    $region25: #{tpu_custom_call.1} parent=1 // pred_fallthru
      _
    // Predicated region
    $region26: #{tpu_custom_call.1} parent=1 // pred_check
      _
    $region27: #{tpu_custom_call.1} parent=1 // pred_check_branch
      %68 = sbr.rel (0) target = $region29
    $region28: #{tpu_custom_call.1} parent=1 // pred_region
      %69 = dma.done [#allocation6], 32768
    $region29: #{tpu_custom_call.1} parent=1 // pred_fallthru
      _
    // Predicated region
    $region30: #{tpu_custom_call.1} parent=1 // pred_check
      _
    $region31: #{tpu_custom_call.1} parent=1 // pred_check_branch
      %71 = sbr.rel (0) target = $region33
    $region32: #{tpu_custom_call.1} parent=1 // pred_region
      %72 = dma.done [#allocation6], 1024
    $region33: #{tpu_custom_call.1} parent=1 // pred_fallthru
      _
    // Predicated region
    $region34: #{tpu_custom_call.1} parent=1 // pred_check
      _
    $region35: #{tpu_custom_call.1} parent=1 // pred_check_branch
      %74 = sbr.rel (0) target = $region37
    $region36: #{tpu_custom_call.1} parent=1 // pred_region
      %75 = dma.done [#allocation9], 1024
    $region37: #{tpu_custom_call.1} parent=1 // pred_fallthru
      _
    %v77 = vld [vmem:[#allocation2] sm:$0xff]
    %v78 = vld [vmem:[#allocation2 + $0x8] sm:$0xff]
    %v79 = vld [vmem:[#allocation2 + $0x10] sm:$0xff]
    %v80 = vld [vmem:[#allocation2 + $0x18] sm:$0xff]
    %v81 = vld [vmem:[#allocation2 + $0x20] sm:$0xff]
    %v82 = vld [vmem:[#allocation2 + $0x28] sm:$0xff]
    %v83 = vld [vmem:[#allocation2 + $0x30] sm:$0xff]
    %v84 = vld [vmem:[#allocation2 + $0x38] sm:$0xff]
    %v85 = vld [vmem:[#allocation2 + $0x40] sm:$0xff]
    %v86 = vld [vmem:[#allocation2 + $0x48] sm:$0xff]
    %v87 = vld [vmem:[#allocation2 + $0x50] sm:$0xff]
    %v88 = vld [vmem:[#allocation2 + $0x58] sm:$0xff]
    %v89 = vld [vmem:[#allocation2 + $0x60] sm:$0xff]
    %v90 = vld [vmem:[#allocation2 + $0x68] sm:$0xff]
    %v91 = vld [vmem:[#allocation2 + $0x70] sm:$0xff]
    %v92 = vld [vmem:[#allocation2 + $0x78] sm:$0xff]
    %v93 = vld [vmem:[#allocation2 + $0x80] sm:$0xff]
    %v94 = vld [vmem:[#allocation2 + $0x88] sm:$0xff]
    %v95 = vld [vmem:[#allocation2 + $0x90] sm:$0xff]
    %v96 = vld [vmem:[#allocation2 + $0x98] sm:$0xff]
    %v97 = vld [vmem:[#allocation2 + $0xa0] sm:$0xff]
    %v98 = vld [vmem:[#allocation2 + $0xa8] sm:$0xff]
    %v99 = vld [vmem:[#allocation2 + $0xb0] sm:$0xff]
    %v100 = vld [vmem:[#allocation2 + $0xb8] sm:$0xff]
    %v101 = vld [vmem:[#allocation2 + $0xc0] sm:$0xff]
    %v102 = vld [vmem:[#allocation2 + $0xc8] sm:$0xff]
    %v103 = vld [vmem:[#allocation2 + $0xd0] sm:$0xff]
    %v104 = vld [vmem:[#allocation2 + $0xd8] sm:$0xff]
    %v105 = vld [vmem:[#allocation2 + $0xe0] sm:$0xff]
    %v106 = vld [vmem:[#allocation2 + $0xe8] sm:$0xff]
    %v107 = vld [vmem:[#allocation2 + $0xf0] sm:$0xff]
    %v108 = vld [vmem:[#allocation2 + $0xf8] sm:$0xff]
    %v109 = vld [vmem:[#allocation2 + $0x100] sm:$0xff]
    %v110 = vld [vmem:[#allocation2 + $0x108] sm:$0xff]
    %v111 = vld [vmem:[#allocation2 + $0x110] sm:$0xff]
    %v112 = vld [vmem:[#allocation2 + $0x118] sm:$0xff]
    %v113 = vld [vmem:[#allocation2 + $0x120] sm:$0xff]
    %v114 = vld [vmem:[#allocation2 + $0x128] sm:$0xff]
    %v115 = vld [vmem:[#allocation2 + $0x130] sm:$0xff]
    %v116 = vld [vmem:[#allocation2 + $0x138] sm:$0xff]
    %v117 = vld [vmem:[#allocation2 + $0x140] sm:$0xff]
    %v118 = vld [vmem:[#allocation2 + $0x148] sm:$0xff]
    %v119 = vld [vmem:[#allocation2 + $0x150] sm:$0xff]
    %v120 = vld [vmem:[#allocation2 + $0x158] sm:$0xff]
    %v121 = vld [vmem:[#allocation2 + $0x160] sm:$0xff]
    %v122 = vld [vmem:[#allocation2 + $0x168] sm:$0xff]
    %v123 = vld [vmem:[#allocation2 + $0x170] sm:$0xff]
    %v124 = vld [vmem:[#allocation2 + $0x178] sm:$0xff]
    %v125 = vld [vmem:[#allocation2 + $0x180] sm:$0xff]
    %v126 = vld [vmem:[#allocation2 + $0x188] sm:$0xff]
    %v127 = vld [vmem:[#allocation2 + $0x190] sm:$0xff]
    %v128 = vld [vmem:[#allocation2 + $0x198] sm:$0xff]
    %v129 = vld [vmem:[#allocation2 + $0x1a0] sm:$0xff]
    %v130 = vld [vmem:[#allocation2 + $0x1a8] sm:$0xff]
    %v131 = vld [vmem:[#allocation2 + $0x1b0] sm:$0xff]
    %v132 = vld [vmem:[#allocation2 + $0x1b8] sm:$0xff]
    %v133 = vld [vmem:[#allocation2 + $0x1c0] sm:$0xff]
    %v134 = vld [vmem:[#allocation2 + $0x1c8] sm:$0xff]
    %v135 = vld [vmem:[#allocation2 + $0x1d0] sm:$0xff]
    %v136 = vld [vmem:[#allocation2 + $0x1d8] sm:$0xff]
    %v137 = vld [vmem:[#allocation2 + $0x1e0] sm:$0xff]
    %v138 = vld [vmem:[#allocation2 + $0x1e8] sm:$0xff]
    %v139 = vld [vmem:[#allocation2 + $0x1f0] sm:$0xff]
    %v140 = vld [vmem:[#allocation2 + $0x1f8] sm:$0xff]
    %v141 = vpack.c.bf16 %v109, %v77
    %v142 = vpack.c.bf16 %v110, %v78
    %v143 = vpack.c.bf16 %v111, %v79
    %v144 = vpack.c.bf16 %v112, %v80
    %v145 = vpack.c.bf16 %v113, %v81
    %v146 = vpack.c.bf16 %v114, %v82
    %v147 = vpack.c.bf16 %v115, %v83
    %v148 = vpack.c.bf16 %v116, %v84
    %v149 = vpack.c.bf16 %v117, %v85
    %v150 = vpack.c.bf16 %v118, %v86
    %v151 = vpack.c.bf16 %v119, %v87
    %v152 = vpack.c.bf16 %v120, %v88
    %v153 = vpack.c.bf16 %v121, %v89
    %v154 = vpack.c.bf16 %v122, %v90
    %v155 = vpack.c.bf16 %v123, %v91
    %v156 = vpack.c.bf16 %v124, %v92
    %v157 = vpack.c.bf16 %v125, %v93
    %v158 = vpack.c.bf16 %v126, %v94
    %v159 = vpack.c.bf16 %v127, %v95
    %v160 = vpack.c.bf16 %v128, %v96
    %v161 = vpack.c.bf16 %v129, %v97
    %v162 = vpack.c.bf16 %v130, %v98
    %v163 = vpack.c.bf16 %v131, %v99
    %v164 = vpack.c.bf16 %v132, %v100
    %v165 = vpack.c.bf16 %v133, %v101
    %v166 = vpack.c.bf16 %v134, %v102
    %v167 = vpack.c.bf16 %v135, %v103
    %v168 = vpack.c.bf16 %v136, %v104
    %v169 = vpack.c.bf16 %v137, %v105
    %v170 = vpack.c.bf16 %v138, %v106
    %v171 = vpack.c.bf16 %v139, %v107
    %v172 = vpack.c.bf16 %v140, %v108
    %v173 = vld [vmem:[%s4] sm:$0xff]
    %v174 = vld [vmem:[#allocation5] sm:$0xf]
    %v175 = vld [vmem:[#allocation5 + $0x4] sm:$0xf]
    %v176 = vld [vmem:[#allocation5 + $0x8] sm:$0xf]
    %v177 = vld [vmem:[#allocation5 + $0xc] sm:$0xf]
    %v178 = vld [vmem:[#allocation5 + $0x10] sm:$0xf]
    %v179 = vld [vmem:[#allocation5 + $0x14] sm:$0xf]
    %v180 = vld [vmem:[#allocation5 + $0x18] sm:$0xf]
    %v181 = vld [vmem:[#allocation5 + $0x1c] sm:$0xf]
    %v182 = vld [vmem:[#allocation5 + $0x20] sm:$0xf]
    %v183 = vld [vmem:[#allocation5 + $0x24] sm:$0xf]
    %v184 = vld [vmem:[#allocation5 + $0x28] sm:$0xf]
    %v185 = vld [vmem:[#allocation5 + $0x2c] sm:$0xf]
    %v186 = vld [vmem:[#allocation5 + $0x30] sm:$0xf]
    %v187 = vld [vmem:[#allocation5 + $0x34] sm:$0xf]
    %v188 = vld [vmem:[#allocation5 + $0x38] sm:$0xf]
    %v189 = vld [vmem:[#allocation5 + $0x3c] sm:$0xf]
    %v190 = vld [vmem:[#allocation5 + $0x40] sm:$0xf]
    %v191 = vld [vmem:[#allocation5 + $0x44] sm:$0xf]
    %v192 = vld [vmem:[#allocation5 + $0x48] sm:$0xf]
    %v193 = vld [vmem:[#allocation5 + $0x4c] sm:$0xf]
    %v194 = vld [vmem:[#allocation5 + $0x50] sm:$0xf]
    %v195 = vld [vmem:[#allocation5 + $0x54] sm:$0xf]
    %v196 = vld [vmem:[#allocation5 + $0x58] sm:$0xf]
    %v197 = vld [vmem:[#allocation5 + $0x5c] sm:$0xf]
    %v198 = vld [vmem:[#allocation5 + $0x60] sm:$0xf]
    %v199 = vld [vmem:[#allocation5 + $0x64] sm:$0xf]
    %v200 = vld [vmem:[#allocation5 + $0x68] sm:$0xf]
    %v201 = vld [vmem:[#allocation5 + $0x6c] sm:$0xf]
    %v202 = vld [vmem:[#allocation5 + $0x70] sm:$0xf]
    %v203 = vld [vmem:[#allocation5 + $0x74] sm:$0xf]
    %v204 = vld [vmem:[#allocation5 + $0x78] sm:$0xf]
    %v205 = vld [vmem:[#allocation5 + $0x7c] sm:$0xf]
    %v206 = vld [vmem:[#allocation5 + $0x80] sm:$0xf]
    %v207 = vld [vmem:[#allocation5 + $0x84] sm:$0xf]
    %v208 = vld [vmem:[#allocation5 + $0x88] sm:$0xf]
    %v209 = vld [vmem:[#allocation5 + $0x8c] sm:$0xf]
    %v210 = vld [vmem:[#allocation5 + $0x90] sm:$0xf]
    %v211 = vld [vmem:[#allocation5 + $0x94] sm:$0xf]
    %v212 = vld [vmem:[#allocation5 + $0x98] sm:$0xf]
    %v213 = vld [vmem:[#allocation5 + $0x9c] sm:$0xf]
    %v214 = vld [vmem:[#allocation5 + $0xa0] sm:$0xf]
    %v215 = vld [vmem:[#allocation5 + $0xa4] sm:$0xf]
    %v216 = vld [vmem:[#allocation5 + $0xa8] sm:$0xf]
    %v217 = vld [vmem:[#allocation5 + $0xac] sm:$0xf]
    %v218 = vld [vmem:[#allocation5 + $0xb0] sm:$0xf]
    %v219 = vld [vmem:[#allocation5 + $0xb4] sm:$0xf]
    %v220 = vld [vmem:[#allocation5 + $0xb8] sm:$0xf]
    %v221 = vld [vmem:[#allocation5 + $0xbc] sm:$0xf]
    %v222 = vld [vmem:[#allocation5 + $0xc0] sm:$0xf]
    %v223 = vld [vmem:[#allocation5 + $0xc4] sm:$0xf]
    %v224 = vld [vmem:[#allocation5 + $0xc8] sm:$0xf]
    %v225 = vld [vmem:[#allocation5 + $0xcc] sm:$0xf]
    %v226 = vld [vmem:[#allocation5 + $0xd0] sm:$0xf]
    %v227 = vld [vmem:[#allocation5 + $0xd4] sm:$0xf]
    %v228 = vld [vmem:[#allocation5 + $0xd8] sm:$0xf]
    %v229 = vld [vmem:[#allocation5 + $0xdc] sm:$0xf]
    %v230 = vld [vmem:[#allocation5 + $0xe0] sm:$0xf]
    %v231 = vld [vmem:[#allocation5 + $0xe4] sm:$0xf]
    %v232 = vld [vmem:[#allocation5 + $0xe8] sm:$0xf]
    %v233 = vld [vmem:[#allocation5 + $0xec] sm:$0xf]
    %v234 = vld [vmem:[#allocation5 + $0xf0] sm:$0xf]
    %v235 = vld [vmem:[#allocation5 + $0xf4] sm:$0xf]
    %v236 = vld [vmem:[#allocation5 + $0xf8] sm:$0xf]
    %v237 = vld [vmem:[#allocation5 + $0xfc] sm:$0xf]
    %v238 = vld [vmem:[#allocation5 + $0x100] sm:$0xf]
    %v239 = vld [vmem:[#allocation5 + $0x104] sm:$0xf]
    %v240 = vld [vmem:[#allocation5 + $0x108] sm:$0xf]
    %v241 = vld [vmem:[#allocation5 + $0x10c] sm:$0xf]
    %v242 = vld [vmem:[#allocation5 + $0x110] sm:$0xf]
    %v243 = vld [vmem:[#allocation5 + $0x114] sm:$0xf]
    %v244 = vld [vmem:[#allocation5 + $0x118] sm:$0xf]
    %v245 = vld [vmem:[#allocation5 + $0x11c] sm:$0xf]
    %v246 = vld [vmem:[#allocation5 + $0x120] sm:$0xf]
    %v247 = vld [vmem:[#allocation5 + $0x124] sm:$0xf]
    %v248 = vld [vmem:[#allocation5 + $0x128] sm:$0xf]
    %v249 = vld [vmem:[#allocation5 + $0x12c] sm:$0xf]
    %v250 = vld [vmem:[#allocation5 + $0x130] sm:$0xf]
    %v251 = vld [vmem:[#allocation5 + $0x134] sm:$0xf]
    %v252 = vld [vmem:[#allocation5 + $0x138] sm:$0xf]
    %v253 = vld [vmem:[#allocation5 + $0x13c] sm:$0xf]
    %v254 = vld [vmem:[#allocation5 + $0x140] sm:$0xf]
    %v255 = vld [vmem:[#allocation5 + $0x144] sm:$0xf]
    %v256 = vld [vmem:[#allocation5 + $0x148] sm:$0xf]
    %v257 = vld [vmem:[#allocation5 + $0x14c] sm:$0xf]
    %v258 = vld [vmem:[#allocation5 + $0x150] sm:$0xf]
    %v259 = vld [vmem:[#allocation5 + $0x154] sm:$0xf]
    %v260 = vld [vmem:[#allocation5 + $0x158] sm:$0xf]
    %v261 = vld [vmem:[#allocation5 + $0x15c] sm:$0xf]
    %v262 = vld [vmem:[#allocation5 + $0x160] sm:$0xf]
    %v263 = vld [vmem:[#allocation5 + $0x164] sm:$0xf]
    %v264 = vld [vmem:[#allocation5 + $0x168] sm:$0xf]
    %v265 = vld [vmem:[#allocation5 + $0x16c] sm:$0xf]
    %v266 = vld [vmem:[#allocation5 + $0x170] sm:$0xf]
    %v267 = vld [vmem:[#allocation5 + $0x174] sm:$0xf]
    %v268 = vld [vmem:[#allocation5 + $0x178] sm:$0xf]
    %v269 = vld [vmem:[#allocation5 + $0x17c] sm:$0xf]
    %v270 = vld [vmem:[#allocation5 + $0x180] sm:$0xf]
    %v271 = vld [vmem:[#allocation5 + $0x184] sm:$0xf]
    %v272 = vld [vmem:[#allocation5 + $0x188] sm:$0xf]
    %v273 = vld [vmem:[#allocation5 + $0x18c] sm:$0xf]
    %v274 = vld [vmem:[#allocation5 + $0x190] sm:$0xf]
    %v275 = vld [vmem:[#allocation5 + $0x194] sm:$0xf]
    %v276 = vld [vmem:[#allocation5 + $0x198] sm:$0xf]
    %v277 = vld [vmem:[#allocation5 + $0x19c] sm:$0xf]
    %v278 = vld [vmem:[#allocation5 + $0x1a0] sm:$0xf]
    %v279 = vld [vmem:[#allocation5 + $0x1a4] sm:$0xf]
    %v280 = vld [vmem:[#allocation5 + $0x1a8] sm:$0xf]
    %v281 = vld [vmem:[#allocation5 + $0x1ac] sm:$0xf]
    %v282 = vld [vmem:[#allocation5 + $0x1b0] sm:$0xf]
    %v283 = vld [vmem:[#allocation5 + $0x1b4] sm:$0xf]
    %v284 = vld [vmem:[#allocation5 + $0x1b8] sm:$0xf]
    %v285 = vld [vmem:[#allocation5 + $0x1bc] sm:$0xf]
    %v286 = vld [vmem:[#allocation5 + $0x1c0] sm:$0xf]
    %v287 = vld [vmem:[#allocation5 + $0x1c4] sm:$0xf]
    %v288 = vld [vmem:[#allocation5 + $0x1c8] sm:$0xf]
    %v289 = vld [vmem:[#allocation5 + $0x1cc] sm:$0xf]
    %v290 = vld [vmem:[#allocation5 + $0x1d0] sm:$0xf]
    %v291 = vld [vmem:[#allocation5 + $0x1d4] sm:$0xf]
    %v292 = vld [vmem:[#allocation5 + $0x1d8] sm:$0xf]
    %v293 = vld [vmem:[#allocation5 + $0x1dc] sm:$0xf]
    %v294 = vld [vmem:[#allocation5 + $0x1e0] sm:$0xf]
    %v295 = vld [vmem:[#allocation5 + $0x1e4] sm:$0xf]
    %v296 = vld [vmem:[#allocation5 + $0x1e8] sm:$0xf]
    %v297 = vld [vmem:[#allocation5 + $0x1ec] sm:$0xf]
    %v298 = vld [vmem:[#allocation5 + $0x1f0] sm:$0xf]
    %v299 = vld [vmem:[#allocation5 + $0x1f4] sm:$0xf]
    %v300 = vld [vmem:[#allocation5 + $0x1f8] sm:$0xf]
    %v301 = vld [vmem:[#allocation5 + $0x1fc] sm:$0xf]
    %v302 = vld [vmem:[#allocation5 + $0x200] sm:$0xf]
    %v303 = vld [vmem:[#allocation5 + $0x204] sm:$0xf]
    %v304 = vld [vmem:[#allocation5 + $0x208] sm:$0xf]
    %v305 = vld [vmem:[#allocation5 + $0x20c] sm:$0xf]
    %v306 = vld [vmem:[#allocation5 + $0x210] sm:$0xf]
    %v307 = vld [vmem:[#allocation5 + $0x214] sm:$0xf]
    %v308 = vld [vmem:[#allocation5 + $0x218] sm:$0xf]
    %v309 = vld [vmem:[#allocation5 + $0x21c] sm:$0xf]
    %v310 = vld [vmem:[#allocation5 + $0x220] sm:$0xf]
    %v311 = vld [vmem:[#allocation5 + $0x224] sm:$0xf]
    %v312 = vld [vmem:[#allocation5 + $0x228] sm:$0xf]
    %v313 = vld [vmem:[#allocation5 + $0x22c] sm:$0xf]
    %v314 = vld [vmem:[#allocation5 + $0x230] sm:$0xf]
    %v315 = vld [vmem:[#allocation5 + $0x234] sm:$0xf]
    %v316 = vld [vmem:[#allocation5 + $0x238] sm:$0xf]
    %v317 = vld [vmem:[#allocation5 + $0x23c] sm:$0xf]
    %v318 = vld [vmem:[#allocation5 + $0x240] sm:$0xf]
    %v319 = vld [vmem:[#allocation5 + $0x244] sm:$0xf]
    %v320 = vld [vmem:[#allocation5 + $0x248] sm:$0xf]
    %v321 = vld [vmem:[#allocation5 + $0x24c] sm:$0xf]
    %v322 = vld [vmem:[#allocation5 + $0x250] sm:$0xf]
    %v323 = vld [vmem:[#allocation5 + $0x254] sm:$0xf]
    %v324 = vld [vmem:[#allocation5 + $0x258] sm:$0xf]
    %v325 = vld [vmem:[#allocation5 + $0x25c] sm:$0xf]
    %v326 = vld [vmem:[#allocation5 + $0x260] sm:$0xf]
    %v327 = vld [vmem:[#allocation5 + $0x264] sm:$0xf]
    %v328 = vld [vmem:[#allocation5 + $0x268] sm:$0xf]
    %v329 = vld [vmem:[#allocation5 + $0x26c] sm:$0xf]
    %v330 = vld [vmem:[#allocation5 + $0x270] sm:$0xf]
    %v331 = vld [vmem:[#allocation5 + $0x274] sm:$0xf]
    %v332 = vld [vmem:[#allocation5 + $0x278] sm:$0xf]
    %v333 = vld [vmem:[#allocation5 + $0x27c] sm:$0xf]
    %v334 = vld [vmem:[#allocation5 + $0x280] sm:$0xf]
    %v335 = vld [vmem:[#allocation5 + $0x284] sm:$0xf]
    %v336 = vld [vmem:[#allocation5 + $0x288] sm:$0xf]
    %v337 = vld [vmem:[#allocation5 + $0x28c] sm:$0xf]
    %v338 = vld [vmem:[#allocation5 + $0x290] sm:$0xf]
    %v339 = vld [vmem:[#allocation5 + $0x294] sm:$0xf]
    %v340 = vld [vmem:[#allocation5 + $0x298] sm:$0xf]
    %v341 = vld [vmem:[#allocation5 + $0x29c] sm:$0xf]
    %v342 = vld [vmem:[#allocation5 + $0x2a0] sm:$0xf]
    %v343 = vld [vmem:[#allocation5 + $0x2a4] sm:$0xf]
    %v344 = vld [vmem:[#allocation5 + $0x2a8] sm:$0xf]
    %v345 = vld [vmem:[#allocation5 + $0x2ac] sm:$0xf]
    %v346 = vld [vmem:[#allocation5 + $0x2b0] sm:$0xf]
    %v347 = vld [vmem:[#allocation5 + $0x2b4] sm:$0xf]
    %v348 = vld [vmem:[#allocation5 + $0x2b8] sm:$0xf]
    %v349 = vld [vmem:[#allocation5 + $0x2bc] sm:$0xf]
    %v350 = vld [vmem:[#allocation5 + $0x2c0] sm:$0xf]
    %v351 = vld [vmem:[#allocation5 + $0x2c4] sm:$0xf]
    %v352 = vld [vmem:[#allocation5 + $0x2c8] sm:$0xf]
    %v353 = vld [vmem:[#allocation5 + $0x2cc] sm:$0xf]
    %v354 = vld [vmem:[#allocation5 + $0x2d0] sm:$0xf]
    %v355 = vld [vmem:[#allocation5 + $0x2d4] sm:$0xf]
    %v356 = vld [vmem:[#allocation5 + $0x2d8] sm:$0xf]
    %v357 = vld [vmem:[#allocation5 + $0x2dc] sm:$0xf]
    %v358 = vld [vmem:[#allocation5 + $0x2e0] sm:$0xf]
    %v359 = vld [vmem:[#allocation5 + $0x2e4] sm:$0xf]
    %v360 = vld [vmem:[#allocation5 + $0x2e8] sm:$0xf]
    %v361 = vld [vmem:[#allocation5 + $0x2ec] sm:$0xf]
    %v362 = vld [vmem:[#allocation5 + $0x2f0] sm:$0xf]
    %v363 = vld [vmem:[#allocation5 + $0x2f4] sm:$0xf]
    %v364 = vld [vmem:[#allocation5 + $0x2f8] sm:$0xf]
    %v365 = vld [vmem:[#allocation5 + $0x2fc] sm:$0xf]
    %v366 = vld [vmem:[#allocation5 + $0x300] sm:$0xf]
    %v367 = vld [vmem:[#allocation5 + $0x304] sm:$0xf]
    %v368 = vld [vmem:[#allocation5 + $0x308] sm:$0xf]
    %v369 = vld [vmem:[#allocation5 + $0x30c] sm:$0xf]
    %v370 = vld [vmem:[#allocation5 + $0x310] sm:$0xf]
    %v371 = vld [vmem:[#allocation5 + $0x314] sm:$0xf]
    %v372 = vld [vmem:[#allocation5 + $0x318] sm:$0xf]
    %v373 = vld [vmem:[#allocation5 + $0x31c] sm:$0xf]
    %v374 = vld [vmem:[#allocation5 + $0x320] sm:$0xf]
    %v375 = vld [vmem:[#allocation5 + $0x324] sm:$0xf]
    %v376 = vld [vmem:[#allocation5 + $0x328] sm:$0xf]
    %v377 = vld [vmem:[#allocation5 + $0x32c] sm:$0xf]
    %v378 = vld [vmem:[#allocation5 + $0x330] sm:$0xf]
    %v379 = vld [vmem:[#allocation5 + $0x334] sm:$0xf]
    %v380 = vld [vmem:[#allocation5 + $0x338] sm:$0xf]
    %v381 = vld [vmem:[#allocation5 + $0x33c] sm:$0xf]
    %v382 = vld [vmem:[#allocation5 + $0x340] sm:$0xf]
    %v383 = vld [vmem:[#allocation5 + $0x344] sm:$0xf]
    %v384 = vld [vmem:[#allocation5 + $0x348] sm:$0xf]
    %v385 = vld [vmem:[#allocation5 + $0x34c] sm:$0xf]
    %v386 = vld [vmem:[#allocation5 + $0x350] sm:$0xf]
    %v387 = vld [vmem:[#allocation5 + $0x354] sm:$0xf]
    %v388 = vld [vmem:[#allocation5 + $0x358] sm:$0xf]
    %v389 = vld [vmem:[#allocation5 + $0x35c] sm:$0xf]
    %v390 = vld [vmem:[#allocation5 + $0x360] sm:$0xf]
    %v391 = vld [vmem:[#allocation5 + $0x364] sm:$0xf]
    %v392 = vld [vmem:[#allocation5 + $0x368] sm:$0xf]
    %v393 = vld [vmem:[#allocation5 + $0x36c] sm:$0xf]
    %v394 = vld [vmem:[#allocation5 + $0x370] sm:$0xf]
    %v395 = vld [vmem:[#allocation5 + $0x374] sm:$0xf]
    %v396 = vld [vmem:[#allocation5 + $0x378] sm:$0xf]
    %v397 = vld [vmem:[#allocation5 + $0x37c] sm:$0xf]
    %v398 = vld [vmem:[#allocation5 + $0x380] sm:$0xf]
    %v399 = vld [vmem:[#allocation5 + $0x384] sm:$0xf]
    %v400 = vld [vmem:[#allocation5 + $0x388] sm:$0xf]
    %v401 = vld [vmem:[#allocation5 + $0x38c] sm:$0xf]
    %v402 = vld [vmem:[#allocation5 + $0x390] sm:$0xf]
    %v403 = vld [vmem:[#allocation5 + $0x394] sm:$0xf]
    %v404 = vld [vmem:[#allocation5 + $0x398] sm:$0xf]
    %v405 = vld [vmem:[#allocation5 + $0x39c] sm:$0xf]
    %v406 = vld [vmem:[#allocation5 + $0x3a0] sm:$0xf]
    %v407 = vld [vmem:[#allocation5 + $0x3a4] sm:$0xf]
    %v408 = vld [vmem:[#allocation5 + $0x3a8] sm:$0xf]
    %v409 = vld [vmem:[#allocation5 + $0x3ac] sm:$0xf]
    %v410 = vld [vmem:[#allocation5 + $0x3b0] sm:$0xf]
    %v411 = vld [vmem:[#allocation5 + $0x3b4] sm:$0xf]
    %v412 = vld [vmem:[#allocation5 + $0x3b8] sm:$0xf]
    %v413 = vld [vmem:[#allocation5 + $0x3bc] sm:$0xf]
    %v414 = vld [vmem:[#allocation5 + $0x3c0] sm:$0xf]
    %v415 = vld [vmem:[#allocation5 + $0x3c4] sm:$0xf]
    %v416 = vld [vmem:[#allocation5 + $0x3c8] sm:$0xf]
    %v417 = vld [vmem:[#allocation5 + $0x3cc] sm:$0xf]
    %v418 = vld [vmem:[#allocation5 + $0x3d0] sm:$0xf]
    %v419 = vld [vmem:[#allocation5 + $0x3d4] sm:$0xf]
    %v420 = vld [vmem:[#allocation5 + $0x3d8] sm:$0xf]
    %v421 = vld [vmem:[#allocation5 + $0x3dc] sm:$0xf]
    %v422 = vld [vmem:[#allocation5 + $0x3e0] sm:$0xf]
    %v423 = vld [vmem:[#allocation5 + $0x3e4] sm:$0xf]
    %v424 = vld [vmem:[#allocation5 + $0x3e8] sm:$0xf]
    %v425 = vld [vmem:[#allocation5 + $0x3ec] sm:$0xf]
    %v426 = vld [vmem:[#allocation5 + $0x3f0] sm:$0xf]
    %v427 = vld [vmem:[#allocation5 + $0x3f4] sm:$0xf]
    %v428 = vld [vmem:[#allocation5 + $0x3f8] sm:$0xf]
    %v429 = vld [vmem:[#allocation5 + $0x3fc] sm:$0xf]
    %v430 = vld [vmem:[#allocation5 + $0x400] sm:$0xf]
    %v431 = vld [vmem:[#allocation5 + $0x404] sm:$0xf]
    %v432 = vld [vmem:[#allocation5 + $0x408] sm:$0xf]
    %v433 = vld [vmem:[#allocation5 + $0x40c] sm:$0xf]
    %v434 = vld [vmem:[#allocation5 + $0x410] sm:$0xf]
    %v435 = vld [vmem:[#allocation5 + $0x414] sm:$0xf]
    %v436 = vld [vmem:[#allocation5 + $0x418] sm:$0xf]
    %v437 = vld [vmem:[#allocation5 + $0x41c] sm:$0xf]
    %v438 = vld [vmem:[#allocation5 + $0x420] sm:$0xf]
    %v439 = vld [vmem:[#allocation5 + $0x424] sm:$0xf]
    %v440 = vld [vmem:[#allocation5 + $0x428] sm:$0xf]
    %v441 = vld [vmem:[#allocation5 + $0x42c] sm:$0xf]
    %v442 = vld [vmem:[#allocation5 + $0x430] sm:$0xf]
    %v443 = vld [vmem:[#allocation5 + $0x434] sm:$0xf]
    %v444 = vld [vmem:[#allocation5 + $0x438] sm:$0xf]
    %v445 = vld [vmem:[#allocation5 + $0x43c] sm:$0xf]
    %v446 = vld [vmem:[#allocation5 + $0x440] sm:$0xf]
    %v447 = vld [vmem:[#allocation5 + $0x444] sm:$0xf]
    %v448 = vld [vmem:[#allocation5 + $0x448] sm:$0xf]
    %v449 = vld [vmem:[#allocation5 + $0x44c] sm:$0xf]
    %v450 = vld [vmem:[#allocation5 + $0x450] sm:$0xf]
    %v451 = vld [vmem:[#allocation5 + $0x454] sm:$0xf]
    %v452 = vld [vmem:[#allocation5 + $0x458] sm:$0xf]
    %v453 = vld [vmem:[#allocation5 + $0x45c] sm:$0xf]
    %v454 = vld [vmem:[#allocation5 + $0x460] sm:$0xf]
    %v455 = vld [vmem:[#allocation5 + $0x464] sm:$0xf]
    %v456 = vld [vmem:[#allocation5 + $0x468] sm:$0xf]
    %v457 = vld [vmem:[#allocation5 + $0x46c] sm:$0xf]
    %v458 = vld [vmem:[#allocation5 + $0x470] sm:$0xf]
    %v459 = vld [vmem:[#allocation5 + $0x474] sm:$0xf]
    %v460 = vld [vmem:[#allocation5 + $0x478] sm:$0xf]
    %v461 = vld [vmem:[#allocation5 + $0x47c] sm:$0xf]
    %v462 = vld [vmem:[#allocation5 + $0x480] sm:$0xf]
    %v463 = vld [vmem:[#allocation5 + $0x484] sm:$0xf]
    %v464 = vld [vmem:[#allocation5 + $0x488] sm:$0xf]
    %v465 = vld [vmem:[#allocation5 + $0x48c] sm:$0xf]
    %v466 = vld [vmem:[#allocation5 + $0x490] sm:$0xf]
    %v467 = vld [vmem:[#allocation5 + $0x494] sm:$0xf]
    %v468 = vld [vmem:[#allocation5 + $0x498] sm:$0xf]
    %v469 = vld [vmem:[#allocation5 + $0x49c] sm:$0xf]
    %v470 = vld [vmem:[#allocation5 + $0x4a0] sm:$0xf]
    %v471 = vld [vmem:[#allocation5 + $0x4a4] sm:$0xf]
    %v472 = vld [vmem:[#allocation5 + $0x4a8] sm:$0xf]
    %v473 = vld [vmem:[#allocation5 + $0x4ac] sm:$0xf]
    %v474 = vld [vmem:[#allocation5 + $0x4b0] sm:$0xf]
    %v475 = vld [vmem:[#allocation5 + $0x4b4] sm:$0xf]
    %v476 = vld [vmem:[#allocation5 + $0x4b8] sm:$0xf]
    %v477 = vld [vmem:[#allocation5 + $0x4bc] sm:$0xf]
    %v478 = vld [vmem:[#allocation5 + $0x4c0] sm:$0xf]
    %v479 = vld [vmem:[#allocation5 + $0x4c4] sm:$0xf]
    %v480 = vld [vmem:[#allocation5 + $0x4c8] sm:$0xf]
    %v481 = vld [vmem:[#allocation5 + $0x4cc] sm:$0xf]
    %v482 = vld [vmem:[#allocation5 + $0x4d0] sm:$0xf]
    %v483 = vld [vmem:[#allocation5 + $0x4d4] sm:$0xf]
    %v484 = vld [vmem:[#allocation5 + $0x4d8] sm:$0xf]
    %v485 = vld [vmem:[#allocation5 + $0x4dc] sm:$0xf]
    %v486 = vld [vmem:[#allocation5 + $0x4e0] sm:$0xf]
    %v487 = vld [vmem:[#allocation5 + $0x4e4] sm:$0xf]
    %v488 = vld [vmem:[#allocation5 + $0x4e8] sm:$0xf]
    %v489 = vld [vmem:[#allocation5 + $0x4ec] sm:$0xf]
    %v490 = vld [vmem:[#allocation5 + $0x4f0] sm:$0xf]
    %v491 = vld [vmem:[#allocation5 + $0x4f4] sm:$0xf]
    %v492 = vld [vmem:[#allocation5 + $0x4f8] sm:$0xf]
    %v493 = vld [vmem:[#allocation5 + $0x4fc] sm:$0xf]
    %v494 = vld [vmem:[#allocation5 + $0x500] sm:$0xf]
    %v495 = vld [vmem:[#allocation5 + $0x504] sm:$0xf]
    %v496 = vld [vmem:[#allocation5 + $0x508] sm:$0xf]
    %v497 = vld [vmem:[#allocation5 + $0x50c] sm:$0xf]
    %v498 = vld [vmem:[#allocation5 + $0x510] sm:$0xf]
    %v499 = vld [vmem:[#allocation5 + $0x514] sm:$0xf]
    %v500 = vld [vmem:[#allocation5 + $0x518] sm:$0xf]
    %v501 = vld [vmem:[#allocation5 + $0x51c] sm:$0xf]
    %v502 = vld [vmem:[#allocation5 + $0x520] sm:$0xf]
    %v503 = vld [vmem:[#allocation5 + $0x524] sm:$0xf]
    %v504 = vld [vmem:[#allocation5 + $0x528] sm:$0xf]
    %v505 = vld [vmem:[#allocation5 + $0x52c] sm:$0xf]
    %v506 = vld [vmem:[#allocation5 + $0x530] sm:$0xf]
    %v507 = vld [vmem:[#allocation5 + $0x534] sm:$0xf]
    %v508 = vld [vmem:[#allocation5 + $0x538] sm:$0xf]
    %v509 = vld [vmem:[#allocation5 + $0x53c] sm:$0xf]
    %v510 = vld [vmem:[#allocation5 + $0x540] sm:$0xf]
    %v511 = vld [vmem:[#allocation5 + $0x544] sm:$0xf]
    %v512 = vld [vmem:[#allocation5 + $0x548] sm:$0xf]
    %v513 = vld [vmem:[#allocation5 + $0x54c] sm:$0xf]
    %v514 = vld [vmem:[#allocation5 + $0x550] sm:$0xf]
    %v515 = vld [vmem:[#allocation5 + $0x554] sm:$0xf]
    %v516 = vld [vmem:[#allocation5 + $0x558] sm:$0xf]
    %v517 = vld [vmem:[#allocation5 + $0x55c] sm:$0xf]
    %v518 = vld [vmem:[#allocation5 + $0x560] sm:$0xf]
    %v519 = vld [vmem:[#allocation5 + $0x564] sm:$0xf]
    %v520 = vld [vmem:[#allocation5 + $0x568] sm:$0xf]
    %v521 = vld [vmem:[#allocation5 + $0x56c] sm:$0xf]
    %v522 = vld [vmem:[#allocation5 + $0x570] sm:$0xf]
    %v523 = vld [vmem:[#allocation5 + $0x574] sm:$0xf]
    %v524 = vld [vmem:[#allocation5 + $0x578] sm:$0xf]
    %v525 = vld [vmem:[#allocation5 + $0x57c] sm:$0xf]
    %v526 = vld [vmem:[#allocation5 + $0x580] sm:$0xf]
    %v527 = vld [vmem:[#allocation5 + $0x584] sm:$0xf]
    %v528 = vld [vmem:[#allocation5 + $0x588] sm:$0xf]
    %v529 = vld [vmem:[#allocation5 + $0x58c] sm:$0xf]
    %v530 = vld [vmem:[#allocation5 + $0x590] sm:$0xf]
    %v531 = vld [vmem:[#allocation5 + $0x594] sm:$0xf]
    %v532 = vld [vmem:[#allocation5 + $0x598] sm:$0xf]
    %v533 = vld [vmem:[#allocation5 + $0x59c] sm:$0xf]
    %v534 = vld [vmem:[#allocation5 + $0x5a0] sm:$0xf]
    %v535 = vld [vmem:[#allocation5 + $0x5a4] sm:$0xf]
    %v536 = vld [vmem:[#allocation5 + $0x5a8] sm:$0xf]
    %v537 = vld [vmem:[#allocation5 + $0x5ac] sm:$0xf]
    %v538 = vld [vmem:[#allocation5 + $0x5b0] sm:$0xf]
    %v539 = vld [vmem:[#allocation5 + $0x5b4] sm:$0xf]
    %v540 = vld [vmem:[#allocation5 + $0x5b8] sm:$0xf]
    %v541 = vld [vmem:[#allocation5 + $0x5bc] sm:$0xf]
    %v542 = vld [vmem:[#allocation5 + $0x5c0] sm:$0xf]
    %v543 = vld [vmem:[#allocation5 + $0x5c4] sm:$0xf]
    %v544 = vld [vmem:[#allocation5 + $0x5c8] sm:$0xf]
    %v545 = vld [vmem:[#allocation5 + $0x5cc] sm:$0xf]
    %v546 = vld [vmem:[#allocation5 + $0x5d0] sm:$0xf]
    %v547 = vld [vmem:[#allocation5 + $0x5d4] sm:$0xf]
    %v548 = vld [vmem:[#allocation5 + $0x5d8] sm:$0xf]
    %v549 = vld [vmem:[#allocation5 + $0x5dc] sm:$0xf]
    %v550 = vld [vmem:[#allocation5 + $0x5e0] sm:$0xf]
    %v551 = vld [vmem:[#allocation5 + $0x5e4] sm:$0xf]
    %v552 = vld [vmem:[#allocation5 + $0x5e8] sm:$0xf]
    %v553 = vld [vmem:[#allocation5 + $0x5ec] sm:$0xf]
    %v554 = vld [vmem:[#allocation5 + $0x5f0] sm:$0xf]
    %v555 = vld [vmem:[#allocation5 + $0x5f4] sm:$0xf]
    %v556 = vld [vmem:[#allocation5 + $0x5f8] sm:$0xf]
    %v557 = vld [vmem:[#allocation5 + $0x5fc] sm:$0xf]
    %v558 = vld [vmem:[#allocation5 + $0x600] sm:$0xf]
    %v559 = vld [vmem:[#allocation5 + $0x604] sm:$0xf]
    %v560 = vld [vmem:[#allocation5 + $0x608] sm:$0xf]
    %v561 = vld [vmem:[#allocation5 + $0x60c] sm:$0xf]
    %v562 = vld [vmem:[#allocation5 + $0x610] sm:$0xf]
    %v563 = vld [vmem:[#allocation5 + $0x614] sm:$0xf]
    %v564 = vld [vmem:[#allocation5 + $0x618] sm:$0xf]
    %v565 = vld [vmem:[#allocation5 + $0x61c] sm:$0xf]
    %v566 = vld [vmem:[#allocation5 + $0x620] sm:$0xf]
    %v567 = vld [vmem:[#allocation5 + $0x624] sm:$0xf]
    %v568 = vld [vmem:[#allocation5 + $0x628] sm:$0xf]
    %v569 = vld [vmem:[#allocation5 + $0x62c] sm:$0xf]
    %v570 = vld [vmem:[#allocation5 + $0x630] sm:$0xf]
    %v571 = vld [vmem:[#allocation5 + $0x634] sm:$0xf]
    %v572 = vld [vmem:[#allocation5 + $0x638] sm:$0xf]
    %v573 = vld [vmem:[#allocation5 + $0x63c] sm:$0xf]
    %v574 = vld [vmem:[#allocation5 + $0x640] sm:$0xf]
    %v575 = vld [vmem:[#allocation5 + $0x644] sm:$0xf]
    %v576 = vld [vmem:[#allocation5 + $0x648] sm:$0xf]
    %v577 = vld [vmem:[#allocation5 + $0x64c] sm:$0xf]
    %v578 = vld [vmem:[#allocation5 + $0x650] sm:$0xf]
    %v579 = vld [vmem:[#allocation5 + $0x654] sm:$0xf]
    %v580 = vld [vmem:[#allocation5 + $0x658] sm:$0xf]
    %v581 = vld [vmem:[#allocation5 + $0x65c] sm:$0xf]
    %v582 = vld [vmem:[#allocation5 + $0x660] sm:$0xf]
    %v583 = vld [vmem:[#allocation5 + $0x664] sm:$0xf]
    %v584 = vld [vmem:[#allocation5 + $0x668] sm:$0xf]
    %v585 = vld [vmem:[#allocation5 + $0x66c] sm:$0xf]
    %v586 = vld [vmem:[#allocation5 + $0x670] sm:$0xf]
    %v587 = vld [vmem:[#allocation5 + $0x674] sm:$0xf]
    %v588 = vld [vmem:[#allocation5 + $0x678] sm:$0xf]
    %v589 = vld [vmem:[#allocation5 + $0x67c] sm:$0xf]
    %v590 = vld [vmem:[#allocation5 + $0x680] sm:$0xf]
    %v591 = vld [vmem:[#allocation5 + $0x684] sm:$0xf]
    %v592 = vld [vmem:[#allocation5 + $0x688] sm:$0xf]
    %v593 = vld [vmem:[#allocation5 + $0x68c] sm:$0xf]
    %v594 = vld [vmem:[#allocation5 + $0x690] sm:$0xf]
    %v595 = vld [vmem:[#allocation5 + $0x694] sm:$0xf]
    %v596 = vld [vmem:[#allocation5 + $0x698] sm:$0xf]
    %v597 = vld [vmem:[#allocation5 + $0x69c] sm:$0xf]
    %v598 = vld [vmem:[#allocation5 + $0x6a0] sm:$0xf]
    %v599 = vld [vmem:[#allocation5 + $0x6a4] sm:$0xf]
    %v600 = vld [vmem:[#allocation5 + $0x6a8] sm:$0xf]
    %v601 = vld [vmem:[#allocation5 + $0x6ac] sm:$0xf]
    %v602 = vld [vmem:[#allocation5 + $0x6b0] sm:$0xf]
    %v603 = vld [vmem:[#allocation5 + $0x6b4] sm:$0xf]
    %v604 = vld [vmem:[#allocation5 + $0x6b8] sm:$0xf]
    %v605 = vld [vmem:[#allocation5 + $0x6bc] sm:$0xf]
    %v606 = vld [vmem:[#allocation5 + $0x6c0] sm:$0xf]
    %v607 = vld [vmem:[#allocation5 + $0x6c4] sm:$0xf]
    %v608 = vld [vmem:[#allocation5 + $0x6c8] sm:$0xf]
    %v609 = vld [vmem:[#allocation5 + $0x6cc] sm:$0xf]
    %v610 = vld [vmem:[#allocation5 + $0x6d0] sm:$0xf]
    %v611 = vld [vmem:[#allocation5 + $0x6d4] sm:$0xf]
    %v612 = vld [vmem:[#allocation5 + $0x6d8] sm:$0xf]
    %v613 = vld [vmem:[#allocation5 + $0x6dc] sm:$0xf]
    %v614 = vld [vmem:[#allocation5 + $0x6e0] sm:$0xf]
    %v615 = vld [vmem:[#allocation5 + $0x6e4] sm:$0xf]
    %v616 = vld [vmem:[#allocation5 + $0x6e8] sm:$0xf]
    %v617 = vld [vmem:[#allocation5 + $0x6ec] sm:$0xf]
    %v618 = vld [vmem:[#allocation5 + $0x6f0] sm:$0xf]
    %v619 = vld [vmem:[#allocation5 + $0x6f4] sm:$0xf]
    %v620 = vld [vmem:[#allocation5 + $0x6f8] sm:$0xf]
    %v621 = vld [vmem:[#allocation5 + $0x6fc] sm:$0xf]
    %v622 = vld [vmem:[#allocation5 + $0x700] sm:$0xf]
    %v623 = vld [vmem:[#allocation5 + $0x704] sm:$0xf]
    %v624 = vld [vmem:[#allocation5 + $0x708] sm:$0xf]
    %v625 = vld [vmem:[#allocation5 + $0x70c] sm:$0xf]
    %v626 = vld [vmem:[#allocation5 + $0x710] sm:$0xf]
    %v627 = vld [vmem:[#allocation5 + $0x714] sm:$0xf]
    %v628 = vld [vmem:[#allocation5 + $0x718] sm:$0xf]
    %v629 = vld [vmem:[#allocation5 + $0x71c] sm:$0xf]
    %v630 = vld [vmem:[#allocation5 + $0x720] sm:$0xf]
    %v631 = vld [vmem:[#allocation5 + $0x724] sm:$0xf]
    %v632 = vld [vmem:[#allocation5 + $0x728] sm:$0xf]
    %v633 = vld [vmem:[#allocation5 + $0x72c] sm:$0xf]
    %v634 = vld [vmem:[#allocation5 + $0x730] sm:$0xf]
    %v635 = vld [vmem:[#allocation5 + $0x734] sm:$0xf]
    %v636 = vld [vmem:[#allocation5 + $0x738] sm:$0xf]
    %v637 = vld [vmem:[#allocation5 + $0x73c] sm:$0xf]
    %v638 = vld [vmem:[#allocation5 + $0x740] sm:$0xf]
    %v639 = vld [vmem:[#allocation5 + $0x744] sm:$0xf]
    %v640 = vld [vmem:[#allocation5 + $0x748] sm:$0xf]
    %v641 = vld [vmem:[#allocation5 + $0x74c] sm:$0xf]
    %v642 = vld [vmem:[#allocation5 + $0x750] sm:$0xf]
    %v643 = vld [vmem:[#allocation5 + $0x754] sm:$0xf]
    %v644 = vld [vmem:[#allocation5 + $0x758] sm:$0xf]
    %v645 = vld [vmem:[#allocation5 + $0x75c] sm:$0xf]
    %v646 = vld [vmem:[#allocation5 + $0x760] sm:$0xf]
    %v647 = vld [vmem:[#allocation5 + $0x764] sm:$0xf]
    %v648 = vld [vmem:[#allocation5 + $0x768] sm:$0xf]
    %v649 = vld [vmem:[#allocation5 + $0x76c] sm:$0xf]
    %v650 = vld [vmem:[#allocation5 + $0x770] sm:$0xf]
    %v651 = vld [vmem:[#allocation5 + $0x774] sm:$0xf]
    %v652 = vld [vmem:[#allocation5 + $0x778] sm:$0xf]
    %v653 = vld [vmem:[#allocation5 + $0x77c] sm:$0xf]
    %v654 = vld [vmem:[#allocation5 + $0x780] sm:$0xf]
    %v655 = vld [vmem:[#allocation5 + $0x784] sm:$0xf]
    %v656 = vld [vmem:[#allocation5 + $0x788] sm:$0xf]
    %v657 = vld [vmem:[#allocation5 + $0x78c] sm:$0xf]
    %v658 = vld [vmem:[#allocation5 + $0x790] sm:$0xf]
    %v659 = vld [vmem:[#allocation5 + $0x794] sm:$0xf]
    %v660 = vld [vmem:[#allocation5 + $0x798] sm:$0xf]
    %v661 = vld [vmem:[#allocation5 + $0x79c] sm:$0xf]
    %v662 = vld [vmem:[#allocation5 + $0x7a0] sm:$0xf]
    %v663 = vld [vmem:[#allocation5 + $0x7a4] sm:$0xf]
    %v664 = vld [vmem:[#allocation5 + $0x7a8] sm:$0xf]
    %v665 = vld [vmem:[#allocation5 + $0x7ac] sm:$0xf]
    %v666 = vld [vmem:[#allocation5 + $0x7b0] sm:$0xf]
    %v667 = vld [vmem:[#allocation5 + $0x7b4] sm:$0xf]
    %v668 = vld [vmem:[#allocation5 + $0x7b8] sm:$0xf]
    %v669 = vld [vmem:[#allocation5 + $0x7bc] sm:$0xf]
    %v670 = vld [vmem:[#allocation5 + $0x7c0] sm:$0xf]
    %v671 = vld [vmem:[#allocation5 + $0x7c4] sm:$0xf]
    %v672 = vld [vmem:[#allocation5 + $0x7c8] sm:$0xf]
    %v673 = vld [vmem:[#allocation5 + $0x7cc] sm:$0xf]
    %v674 = vld [vmem:[#allocation5 + $0x7d0] sm:$0xf]
    %v675 = vld [vmem:[#allocation5 + $0x7d4] sm:$0xf]
    %v676 = vld [vmem:[#allocation5 + $0x7d8] sm:$0xf]
    %v677 = vld [vmem:[#allocation5 + $0x7dc] sm:$0xf]
    %v678 = vld [vmem:[#allocation5 + $0x7e0] sm:$0xf]
    %v679 = vld [vmem:[#allocation5 + $0x7e4] sm:$0xf]
    %v680 = vld [vmem:[#allocation5 + $0x7e8] sm:$0xf]
    %v681 = vld [vmem:[#allocation5 + $0x7ec] sm:$0xf]
    %v682 = vld [vmem:[#allocation5 + $0x7f0] sm:$0xf]
    %v683 = vld [vmem:[#allocation5 + $0x7f4] sm:$0xf]
    %v684 = vld [vmem:[#allocation5 + $0x7f8] sm:$0xf]
    %v685 = vld [vmem:[#allocation5 + $0x7fc] sm:$0xf]
    %v686 = vlaneseq
    %v687 = vshrl.u32 %v686, 7
    %v688 = vsub.s32 0, %v687
    %v689 = vrot.slane %v173, %v688
    %v1202 = vunpack.c.l.b16 %v174
    %v1203 = vunpack.c.l.b16 %v175
    %v1204 = vunpack.c.l.b16 %v176
    %v1205 = vunpack.c.l.b16 %v177
    %v1206 = vunpack.c.l.b16 %v178
    %v1207 = vunpack.c.l.b16 %v179
    %v1208 = vunpack.c.l.b16 %v180
    %v1209 = vunpack.c.l.b16 %v181
    %v1210 = vunpack.c.l.b16 %v182
    %v1211 = vunpack.c.l.b16 %v183
    %v1212 = vunpack.c.l.b16 %v184
    %v1213 = vunpack.c.l.b16 %v185
    %v1214 = vunpack.c.l.b16 %v186
    %v1215 = vunpack.c.l.b16 %v187
    %v1216 = vunpack.c.l.b16 %v188
    %v1217 = vunpack.c.l.b16 %v189
    %v1218 = vunpack.c.l.b16 %v190
    %v1219 = vunpack.c.l.b16 %v191
    %v1220 = vunpack.c.l.b16 %v192
    %v1221 = vunpack.c.l.b16 %v193
    %v1222 = vunpack.c.l.b16 %v194
    %v1223 = vunpack.c.l.b16 %v195
    %v1224 = vunpack.c.l.b16 %v196
    %v1225 = vunpack.c.l.b16 %v197
    %v1226 = vunpack.c.l.b16 %v198
    %v1227 = vunpack.c.l.b16 %v199
    %v1228 = vunpack.c.l.b16 %v200
    %v1229 = vunpack.c.l.b16 %v201
    %v1230 = vunpack.c.l.b16 %v202
    %v1231 = vunpack.c.l.b16 %v203
    %v1232 = vunpack.c.l.b16 %v204
    %v1233 = vunpack.c.l.b16 %v205
    %v1234 = vunpack.c.l.b16 %v206
    %v1235 = vunpack.c.l.b16 %v207
    %v1236 = vunpack.c.l.b16 %v208
    %v1237 = vunpack.c.l.b16 %v209
    %v1238 = vunpack.c.l.b16 %v210
    %v1239 = vunpack.c.l.b16 %v211
    %v1240 = vunpack.c.l.b16 %v212
    %v1241 = vunpack.c.l.b16 %v213
    %v1242 = vunpack.c.l.b16 %v214
    %v1243 = vunpack.c.l.b16 %v215
    %v1244 = vunpack.c.l.b16 %v216
    %v1245 = vunpack.c.l.b16 %v217
    %v1246 = vunpack.c.l.b16 %v218
    %v1247 = vunpack.c.l.b16 %v219
    %v1248 = vunpack.c.l.b16 %v220
    %v1249 = vunpack.c.l.b16 %v221
    %v1250 = vunpack.c.l.b16 %v222
    %v1251 = vunpack.c.l.b16 %v223
    %v1252 = vunpack.c.l.b16 %v224
    %v1253 = vunpack.c.l.b16 %v225
    %v1254 = vunpack.c.l.b16 %v226
    %v1255 = vunpack.c.l.b16 %v227
    %v1256 = vunpack.c.l.b16 %v228
    %v1257 = vunpack.c.l.b16 %v229
    %v1258 = vunpack.c.l.b16 %v230
    %v1259 = vunpack.c.l.b16 %v231
    %v1260 = vunpack.c.l.b16 %v232
    %v1261 = vunpack.c.l.b16 %v233
    %v1262 = vunpack.c.l.b16 %v234
    %v1263 = vunpack.c.l.b16 %v235
    %v1264 = vunpack.c.l.b16 %v236
    %v1265 = vunpack.c.l.b16 %v237
    %v1266 = vunpack.c.l.b16 %v238
    %v1267 = vunpack.c.l.b16 %v239
    %v1268 = vunpack.c.l.b16 %v240
    %v1269 = vunpack.c.l.b16 %v241
    %v1270 = vunpack.c.l.b16 %v242
    %v1271 = vunpack.c.l.b16 %v243
    %v1272 = vunpack.c.l.b16 %v244
    %v1273 = vunpack.c.l.b16 %v245
    %v1274 = vunpack.c.l.b16 %v246
    %v1275 = vunpack.c.l.b16 %v247
    %v1276 = vunpack.c.l.b16 %v248
    %v1277 = vunpack.c.l.b16 %v249
    %v1278 = vunpack.c.l.b16 %v250
    %v1279 = vunpack.c.l.b16 %v251
    %v1280 = vunpack.c.l.b16 %v252
    %v1281 = vunpack.c.l.b16 %v253
    %v1282 = vunpack.c.l.b16 %v254
    %v1283 = vunpack.c.l.b16 %v255
    %v1284 = vunpack.c.l.b16 %v256
    %v1285 = vunpack.c.l.b16 %v257
    %v1286 = vunpack.c.l.b16 %v258
    %v1287 = vunpack.c.l.b16 %v259
    %v1288 = vunpack.c.l.b16 %v260
    %v1289 = vunpack.c.l.b16 %v261
    %v1290 = vunpack.c.l.b16 %v262
    %v1291 = vunpack.c.l.b16 %v263
    %v1292 = vunpack.c.l.b16 %v264
    %v1293 = vunpack.c.l.b16 %v265
    %v1294 = vunpack.c.l.b16 %v266
    %v1295 = vunpack.c.l.b16 %v267
    %v1296 = vunpack.c.l.b16 %v268
    %v1297 = vunpack.c.l.b16 %v269
    %v1298 = vunpack.c.l.b16 %v270
    %v1299 = vunpack.c.l.b16 %v271
    %v1300 = vunpack.c.l.b16 %v272
    %v1301 = vunpack.c.l.b16 %v273
    %v1302 = vunpack.c.l.b16 %v274
    %v1303 = vunpack.c.l.b16 %v275
    %v1304 = vunpack.c.l.b16 %v276
    %v1305 = vunpack.c.l.b16 %v277
    %v1306 = vunpack.c.l.b16 %v278
    %v1307 = vunpack.c.l.b16 %v279
    %v1308 = vunpack.c.l.b16 %v280
    %v1309 = vunpack.c.l.b16 %v281
    %v1310 = vunpack.c.l.b16 %v282
    %v1311 = vunpack.c.l.b16 %v283
    %v1312 = vunpack.c.l.b16 %v284
    %v1313 = vunpack.c.l.b16 %v285
    %v1314 = vunpack.c.l.b16 %v286
    %v1315 = vunpack.c.l.b16 %v287
    %v1316 = vunpack.c.l.b16 %v288
    %v1317 = vunpack.c.l.b16 %v289
    %v1318 = vunpack.c.l.b16 %v290
    %v1319 = vunpack.c.l.b16 %v291
    %v1320 = vunpack.c.l.b16 %v292
    %v1321 = vunpack.c.l.b16 %v293
    %v1322 = vunpack.c.l.b16 %v294
    %v1323 = vunpack.c.l.b16 %v295
    %v1324 = vunpack.c.l.b16 %v296
    %v1325 = vunpack.c.l.b16 %v297
    %v1326 = vunpack.c.l.b16 %v298
    %v1327 = vunpack.c.l.b16 %v299
    %v1328 = vunpack.c.l.b16 %v300
    %v1329 = vunpack.c.l.b16 %v301
    %v1330 = vunpack.c.l.b16 %v302
    %v1331 = vunpack.c.l.b16 %v303
    %v1332 = vunpack.c.l.b16 %v304
    %v1333 = vunpack.c.l.b16 %v305
    %v1334 = vunpack.c.l.b16 %v306
    %v1335 = vunpack.c.l.b16 %v307
    %v1336 = vunpack.c.l.b16 %v308
    %v1337 = vunpack.c.l.b16 %v309
    %v1338 = vunpack.c.l.b16 %v310
    %v1339 = vunpack.c.l.b16 %v311
    %v1340 = vunpack.c.l.b16 %v312
    %v1341 = vunpack.c.l.b16 %v313
    %v1342 = vunpack.c.l.b16 %v314
    %v1343 = vunpack.c.l.b16 %v315
    %v1344 = vunpack.c.l.b16 %v316
    %v1345 = vunpack.c.l.b16 %v317
    %v1346 = vunpack.c.l.b16 %v318
    %v1347 = vunpack.c.l.b16 %v319
    %v1348 = vunpack.c.l.b16 %v320
    %v1349 = vunpack.c.l.b16 %v321
    %v1350 = vunpack.c.l.b16 %v322
    %v1351 = vunpack.c.l.b16 %v323
    %v1352 = vunpack.c.l.b16 %v324
    %v1353 = vunpack.c.l.b16 %v325
    %v1354 = vunpack.c.l.b16 %v326
    %v1355 = vunpack.c.l.b16 %v327
    %v1356 = vunpack.c.l.b16 %v328
    %v1357 = vunpack.c.l.b16 %v329
    %v1358 = vunpack.c.l.b16 %v330
    %v1359 = vunpack.c.l.b16 %v331
    %v1360 = vunpack.c.l.b16 %v332
    %v1361 = vunpack.c.l.b16 %v333
    %v1362 = vunpack.c.l.b16 %v334
    %v1363 = vunpack.c.l.b16 %v335
    %v1364 = vunpack.c.l.b16 %v336
    %v1365 = vunpack.c.l.b16 %v337
    %v1366 = vunpack.c.l.b16 %v338
    %v1367 = vunpack.c.l.b16 %v339
    %v1368 = vunpack.c.l.b16 %v340
    %v1369 = vunpack.c.l.b16 %v341
    %v1370 = vunpack.c.l.b16 %v342
    %v1371 = vunpack.c.l.b16 %v343
    %v1372 = vunpack.c.l.b16 %v344
    %v1373 = vunpack.c.l.b16 %v345
    %v1374 = vunpack.c.l.b16 %v346
    %v1375 = vunpack.c.l.b16 %v347
    %v1376 = vunpack.c.l.b16 %v348
    %v1377 = vunpack.c.l.b16 %v349
    %v1378 = vunpack.c.l.b16 %v350
    %v1379 = vunpack.c.l.b16 %v351
    %v1380 = vunpack.c.l.b16 %v352
    %v1381 = vunpack.c.l.b16 %v353
    %v1382 = vunpack.c.l.b16 %v354
    %v1383 = vunpack.c.l.b16 %v355
    %v1384 = vunpack.c.l.b16 %v356
    %v1385 = vunpack.c.l.b16 %v357
    %v1386 = vunpack.c.l.b16 %v358
    %v1387 = vunpack.c.l.b16 %v359
    %v1388 = vunpack.c.l.b16 %v360
    %v1389 = vunpack.c.l.b16 %v361
    %v1390 = vunpack.c.l.b16 %v362
    %v1391 = vunpack.c.l.b16 %v363
    %v1392 = vunpack.c.l.b16 %v364
    %v1393 = vunpack.c.l.b16 %v365
    %v1394 = vunpack.c.l.b16 %v366
    %v1395 = vunpack.c.l.b16 %v367
    %v1396 = vunpack.c.l.b16 %v368
    %v1397 = vunpack.c.l.b16 %v369
    %v1398 = vunpack.c.l.b16 %v370
    %v1399 = vunpack.c.l.b16 %v371
    %v1400 = vunpack.c.l.b16 %v372
    %v1401 = vunpack.c.l.b16 %v373
    %v1402 = vunpack.c.l.b16 %v374
    %v1403 = vunpack.c.l.b16 %v375
    %v1404 = vunpack.c.l.b16 %v376
    %v1405 = vunpack.c.l.b16 %v377
    %v1406 = vunpack.c.l.b16 %v378
    %v1407 = vunpack.c.l.b16 %v379
    %v1408 = vunpack.c.l.b16 %v380
    %v1409 = vunpack.c.l.b16 %v381
    %v1410 = vunpack.c.l.b16 %v382
    %v1411 = vunpack.c.l.b16 %v383
    %v1412 = vunpack.c.l.b16 %v384
    %v1413 = vunpack.c.l.b16 %v385
    %v1414 = vunpack.c.l.b16 %v386
    %v1415 = vunpack.c.l.b16 %v387
    %v1416 = vunpack.c.l.b16 %v388
    %v1417 = vunpack.c.l.b16 %v389
    %v1418 = vunpack.c.l.b16 %v390
    %v1419 = vunpack.c.l.b16 %v391
    %v1420 = vunpack.c.l.b16 %v392
    %v1421 = vunpack.c.l.b16 %v393
    %v1422 = vunpack.c.l.b16 %v394
    %v1423 = vunpack.c.l.b16 %v395
    %v1424 = vunpack.c.l.b16 %v396
    %v1425 = vunpack.c.l.b16 %v397
    %v1426 = vunpack.c.l.b16 %v398
    %v1427 = vunpack.c.l.b16 %v399
    %v1428 = vunpack.c.l.b16 %v400
    %v1429 = vunpack.c.l.b16 %v401
    %v1430 = vunpack.c.l.b16 %v402
    %v1431 = vunpack.c.l.b16 %v403
    %v1432 = vunpack.c.l.b16 %v404
    %v1433 = vunpack.c.l.b16 %v405
    %v1434 = vunpack.c.l.b16 %v406
    %v1435 = vunpack.c.l.b16 %v407
    %v1436 = vunpack.c.l.b16 %v408
    %v1437 = vunpack.c.l.b16 %v409
    %v1438 = vunpack.c.l.b16 %v410
    %v1439 = vunpack.c.l.b16 %v411
    %v1440 = vunpack.c.l.b16 %v412
    %v1441 = vunpack.c.l.b16 %v413
    %v1442 = vunpack.c.l.b16 %v414
    %v1443 = vunpack.c.l.b16 %v415
    %v1444 = vunpack.c.l.b16 %v416
    %v1445 = vunpack.c.l.b16 %v417
    %v1446 = vunpack.c.l.b16 %v418
    %v1447 = vunpack.c.l.b16 %v419
    %v1448 = vunpack.c.l.b16 %v420
    %v1449 = vunpack.c.l.b16 %v421
    %v1450 = vunpack.c.l.b16 %v422
    %v1451 = vunpack.c.l.b16 %v423
    %v1452 = vunpack.c.l.b16 %v424
    %v1453 = vunpack.c.l.b16 %v425
    %v1454 = vunpack.c.l.b16 %v426
    %v1455 = vunpack.c.l.b16 %v427
    %v1456 = vunpack.c.l.b16 %v428
    %v1457 = vunpack.c.l.b16 %v429
    %v1458 = vunpack.c.l.b16 %v430
    %v1459 = vunpack.c.l.b16 %v431
    %v1460 = vunpack.c.l.b16 %v432
    %v1461 = vunpack.c.l.b16 %v433
    %v1462 = vunpack.c.l.b16 %v434
    %v1463 = vunpack.c.l.b16 %v435
    %v1464 = vunpack.c.l.b16 %v436
    %v1465 = vunpack.c.l.b16 %v437
    %v1466 = vunpack.c.l.b16 %v438
    %v1467 = vunpack.c.l.b16 %v439
    %v1468 = vunpack.c.l.b16 %v440
    %v1469 = vunpack.c.l.b16 %v441
    %v1470 = vunpack.c.l.b16 %v442
    %v1471 = vunpack.c.l.b16 %v443
    %v1472 = vunpack.c.l.b16 %v444
    %v1473 = vunpack.c.l.b16 %v445
    %v1474 = vunpack.c.l.b16 %v446
    %v1475 = vunpack.c.l.b16 %v447
    %v1476 = vunpack.c.l.b16 %v448
    %v1477 = vunpack.c.l.b16 %v449
    %v1478 = vunpack.c.l.b16 %v450
    %v1479 = vunpack.c.l.b16 %v451
    %v1480 = vunpack.c.l.b16 %v452
    %v1481 = vunpack.c.l.b16 %v453
    %v1482 = vunpack.c.l.b16 %v454
    %v1483 = vunpack.c.l.b16 %v455
    %v1484 = vunpack.c.l.b16 %v456
    %v1485 = vunpack.c.l.b16 %v457
    %v1486 = vunpack.c.l.b16 %v458
    %v1487 = vunpack.c.l.b16 %v459
    %v1488 = vunpack.c.l.b16 %v460
    %v1489 = vunpack.c.l.b16 %v461
    %v1490 = vunpack.c.l.b16 %v462
    %v1491 = vunpack.c.l.b16 %v463
    %v1492 = vunpack.c.l.b16 %v464
    %v1493 = vunpack.c.l.b16 %v465
    %v1494 = vunpack.c.l.b16 %v466
    %v1495 = vunpack.c.l.b16 %v467
    %v1496 = vunpack.c.l.b16 %v468
    %v1497 = vunpack.c.l.b16 %v469
    %v1498 = vunpack.c.l.b16 %v470
    %v1499 = vunpack.c.l.b16 %v471
    %v1500 = vunpack.c.l.b16 %v472
    %v1501 = vunpack.c.l.b16 %v473
    %v1502 = vunpack.c.l.b16 %v474
    %v1503 = vunpack.c.l.b16 %v475
    %v1504 = vunpack.c.l.b16 %v476
    %v1505 = vunpack.c.l.b16 %v477
    %v1506 = vunpack.c.l.b16 %v478
    %v1507 = vunpack.c.l.b16 %v479
    %v1508 = vunpack.c.l.b16 %v480
    %v1509 = vunpack.c.l.b16 %v481
    %v1510 = vunpack.c.l.b16 %v482
    %v1511 = vunpack.c.l.b16 %v483
    %v1512 = vunpack.c.l.b16 %v484
    %v1513 = vunpack.c.l.b16 %v485
    %v1514 = vunpack.c.l.b16 %v486
    %v1515 = vunpack.c.l.b16 %v487
    %v1516 = vunpack.c.l.b16 %v488
    %v1517 = vunpack.c.l.b16 %v489
    %v1518 = vunpack.c.l.b16 %v490
    %v1519 = vunpack.c.l.b16 %v491
    %v1520 = vunpack.c.l.b16 %v492
    %v1521 = vunpack.c.l.b16 %v493
    %v1522 = vunpack.c.l.b16 %v494
    %v1523 = vunpack.c.l.b16 %v495
    %v1524 = vunpack.c.l.b16 %v496
    %v1525 = vunpack.c.l.b16 %v497
    %v1526 = vunpack.c.l.b16 %v498
    %v1527 = vunpack.c.l.b16 %v499
    %v1528 = vunpack.c.l.b16 %v500
    %v1529 = vunpack.c.l.b16 %v501
    %v1530 = vunpack.c.l.b16 %v502
    %v1531 = vunpack.c.l.b16 %v503
    %v1532 = vunpack.c.l.b16 %v504
    %v1533 = vunpack.c.l.b16 %v505
    %v1534 = vunpack.c.l.b16 %v506
    %v1535 = vunpack.c.l.b16 %v507
    %v1536 = vunpack.c.l.b16 %v508
    %v1537 = vunpack.c.l.b16 %v509
    %v1538 = vunpack.c.l.b16 %v510
    %v1539 = vunpack.c.l.b16 %v511
    %v1540 = vunpack.c.l.b16 %v512
    %v1541 = vunpack.c.l.b16 %v513
    %v1542 = vunpack.c.l.b16 %v514
    %v1543 = vunpack.c.l.b16 %v515
    %v1544 = vunpack.c.l.b16 %v516
    %v1545 = vunpack.c.l.b16 %v517
    %v1546 = vunpack.c.l.b16 %v518
    %v1547 = vunpack.c.l.b16 %v519
    %v1548 = vunpack.c.l.b16 %v520
    %v1549 = vunpack.c.l.b16 %v521
    %v1550 = vunpack.c.l.b16 %v522
    %v1551 = vunpack.c.l.b16 %v523
    %v1552 = vunpack.c.l.b16 %v524
    %v1553 = vunpack.c.l.b16 %v525
    %v1554 = vunpack.c.l.b16 %v526
    %v1555 = vunpack.c.l.b16 %v527
    %v1556 = vunpack.c.l.b16 %v528
    %v1557 = vunpack.c.l.b16 %v529
    %v1558 = vunpack.c.l.b16 %v530
    %v1559 = vunpack.c.l.b16 %v531
    %v1560 = vunpack.c.l.b16 %v532
    %v1561 = vunpack.c.l.b16 %v533
    %v1562 = vunpack.c.l.b16 %v534
    %v1563 = vunpack.c.l.b16 %v535
    %v1564 = vunpack.c.l.b16 %v536
    %v1565 = vunpack.c.l.b16 %v537
    %v1566 = vunpack.c.l.b16 %v538
    %v1567 = vunpack.c.l.b16 %v539
    %v1568 = vunpack.c.l.b16 %v540
    %v1569 = vunpack.c.l.b16 %v541
    %v1570 = vunpack.c.l.b16 %v542
    %v1571 = vunpack.c.l.b16 %v543
    %v1572 = vunpack.c.l.b16 %v544
    %v1573 = vunpack.c.l.b16 %v545
    %v1574 = vunpack.c.l.b16 %v546
    %v1575 = vunpack.c.l.b16 %v547
    %v1576 = vunpack.c.l.b16 %v548
    %v1577 = vunpack.c.l.b16 %v549
    %v1578 = vunpack.c.l.b16 %v550
    %v1579 = vunpack.c.l.b16 %v551
    %v1580 = vunpack.c.l.b16 %v552
    %v1581 = vunpack.c.l.b16 %v553
    %v1582 = vunpack.c.l.b16 %v554
    %v1583 = vunpack.c.l.b16 %v555
    %v1584 = vunpack.c.l.b16 %v556
    %v1585 = vunpack.c.l.b16 %v557
    %v1586 = vunpack.c.l.b16 %v558
    %v1587 = vunpack.c.l.b16 %v559
    %v1588 = vunpack.c.l.b16 %v560
    %v1589 = vunpack.c.l.b16 %v561
    %v1590 = vunpack.c.l.b16 %v562
    %v1591 = vunpack.c.l.b16 %v563
    %v1592 = vunpack.c.l.b16 %v564
    %v1593 = vunpack.c.l.b16 %v565
    %v1594 = vunpack.c.l.b16 %v566
    %v1595 = vunpack.c.l.b16 %v567
    %v1596 = vunpack.c.l.b16 %v568
    %v1597 = vunpack.c.l.b16 %v569
    %v1598 = vunpack.c.l.b16 %v570
    %v1599 = vunpack.c.l.b16 %v571
    %v1600 = vunpack.c.l.b16 %v572
    %v1601 = vunpack.c.l.b16 %v573
    %v1602 = vunpack.c.l.b16 %v574
    %v1603 = vunpack.c.l.b16 %v575
    %v1604 = vunpack.c.l.b16 %v576
    %v1605 = vunpack.c.l.b16 %v577
    %v1606 = vunpack.c.l.b16 %v578
    %v1607 = vunpack.c.l.b16 %v579
    %v1608 = vunpack.c.l.b16 %v580
    %v1609 = vunpack.c.l.b16 %v581
    %v1610 = vunpack.c.l.b16 %v582
    %v1611 = vunpack.c.l.b16 %v583
    %v1612 = vunpack.c.l.b16 %v584
    %v1613 = vunpack.c.l.b16 %v585
    %v1614 = vunpack.c.l.b16 %v586
    %v1615 = vunpack.c.l.b16 %v587
    %v1616 = vunpack.c.l.b16 %v588
    %v1617 = vunpack.c.l.b16 %v589
    %v1618 = vunpack.c.l.b16 %v590
    %v1619 = vunpack.c.l.b16 %v591
    %v1620 = vunpack.c.l.b16 %v592
    %v1621 = vunpack.c.l.b16 %v593
    %v1622 = vunpack.c.l.b16 %v594
    %v1623 = vunpack.c.l.b16 %v595
    %v1624 = vunpack.c.l.b16 %v596
    %v1625 = vunpack.c.l.b16 %v597
    %v1626 = vunpack.c.l.b16 %v598
    %v1627 = vunpack.c.l.b16 %v599
    %v1628 = vunpack.c.l.b16 %v600
    %v1629 = vunpack.c.l.b16 %v601
    %v1630 = vunpack.c.l.b16 %v602
    %v1631 = vunpack.c.l.b16 %v603
    %v1632 = vunpack.c.l.b16 %v604
    %v1633 = vunpack.c.l.b16 %v605
    %v1634 = vunpack.c.l.b16 %v606
    %v1635 = vunpack.c.l.b16 %v607
    %v1636 = vunpack.c.l.b16 %v608
    %v1637 = vunpack.c.l.b16 %v609
    %v1638 = vunpack.c.l.b16 %v610
    %v1639 = vunpack.c.l.b16 %v611
    %v1640 = vunpack.c.l.b16 %v612
    %v1641 = vunpack.c.l.b16 %v613
    %v1642 = vunpack.c.l.b16 %v614
    %v1643 = vunpack.c.l.b16 %v615
    %v1644 = vunpack.c.l.b16 %v616
    %v1645 = vunpack.c.l.b16 %v617
    %v1646 = vunpack.c.l.b16 %v618
    %v1647 = vunpack.c.l.b16 %v619
    %v1648 = vunpack.c.l.b16 %v620
    %v1649 = vunpack.c.l.b16 %v621
    %v1650 = vunpack.c.l.b16 %v622
    %v1651 = vunpack.c.l.b16 %v623
    %v1652 = vunpack.c.l.b16 %v624
    %v1653 = vunpack.c.l.b16 %v625
    %v1654 = vunpack.c.l.b16 %v626
    %v1655 = vunpack.c.l.b16 %v627
    %v1656 = vunpack.c.l.b16 %v628
    %v1657 = vunpack.c.l.b16 %v629
    %v1658 = vunpack.c.l.b16 %v630
    %v1659 = vunpack.c.l.b16 %v631
    %v1660 = vunpack.c.l.b16 %v632
    %v1661 = vunpack.c.l.b16 %v633
    %v1662 = vunpack.c.l.b16 %v634
    %v1663 = vunpack.c.l.b16 %v635
    %v1664 = vunpack.c.l.b16 %v636
    %v1665 = vunpack.c.l.b16 %v637
    %v1666 = vunpack.c.l.b16 %v638
    %v1667 = vunpack.c.l.b16 %v639
    %v1668 = vunpack.c.l.b16 %v640
    %v1669 = vunpack.c.l.b16 %v641
    %v1670 = vunpack.c.l.b16 %v642
    %v1671 = vunpack.c.l.b16 %v643
    %v1672 = vunpack.c.l.b16 %v644
    %v1673 = vunpack.c.l.b16 %v645
    %v1674 = vunpack.c.l.b16 %v646
    %v1675 = vunpack.c.l.b16 %v647
    %v1676 = vunpack.c.l.b16 %v648
    %v1677 = vunpack.c.l.b16 %v649
    %v1678 = vunpack.c.l.b16 %v650
    %v1679 = vunpack.c.l.b16 %v651
    %v1680 = vunpack.c.l.b16 %v652
    %v1681 = vunpack.c.l.b16 %v653
    %v1682 = vunpack.c.l.b16 %v654
    %v1683 = vunpack.c.l.b16 %v655
    %v1684 = vunpack.c.l.b16 %v656
    %v1685 = vunpack.c.l.b16 %v657
    %v1686 = vunpack.c.l.b16 %v658
    %v1687 = vunpack.c.l.b16 %v659
    %v1688 = vunpack.c.l.b16 %v660
    %v1689 = vunpack.c.l.b16 %v661
    %v1690 = vunpack.c.l.b16 %v662
    %v1691 = vunpack.c.l.b16 %v663
    %v1692 = vunpack.c.l.b16 %v664
    %v1693 = vunpack.c.l.b16 %v665
    %v1694 = vunpack.c.l.b16 %v666
    %v1695 = vunpack.c.l.b16 %v667
    %v1696 = vunpack.c.l.b16 %v668
    %v1697 = vunpack.c.l.b16 %v669
    %v1698 = vunpack.c.l.b16 %v670
    %v1699 = vunpack.c.l.b16 %v671
    %v1700 = vunpack.c.l.b16 %v672
    %v1701 = vunpack.c.l.b16 %v673
    %v1702 = vunpack.c.l.b16 %v674
    %v1703 = vunpack.c.l.b16 %v675
    %v1704 = vunpack.c.l.b16 %v676
    %v1705 = vunpack.c.l.b16 %v677
    %v1706 = vunpack.c.l.b16 %v678
    %v1707 = vunpack.c.l.b16 %v679
    %v1708 = vunpack.c.l.b16 %v680
    %v1709 = vunpack.c.l.b16 %v681
    %v1710 = vunpack.c.l.b16 %v682
    %v1711 = vunpack.c.l.b16 %v683
    %v1712 = vunpack.c.l.b16 %v684
    %v1713 = vunpack.c.l.b16 %v685
    %v1714 = vpack.c.b16 %v1203, %v1202
    %v1715 = vpack.c.b16 %v1205, %v1204
    %v1716 = vpack.c.b16 %v1207, %v1206
    %v1717 = vpack.c.b16 %v1209, %v1208
    %v1718 = vpack.c.b16 %v1211, %v1210
    %v1719 = vpack.c.b16 %v1213, %v1212
    %v1720 = vpack.c.b16 %v1215, %v1214
    %v1721 = vpack.c.b16 %v1217, %v1216
    %v1722 = vpack.c.b16 %v1219, %v1218
    %v1723 = vpack.c.b16 %v1221, %v1220
    %v1724 = vpack.c.b16 %v1223, %v1222
    %v1725 = vpack.c.b16 %v1225, %v1224
    %v1726 = vpack.c.b16 %v1227, %v1226
    %v1727 = vpack.c.b16 %v1229, %v1228
    %v1728 = vpack.c.b16 %v1231, %v1230
    %v1729 = vpack.c.b16 %v1233, %v1232
    %v1730 = vpack.c.b16 %v1235, %v1234
    %v1731 = vpack.c.b16 %v1237, %v1236
    %v1732 = vpack.c.b16 %v1239, %v1238
    %v1733 = vpack.c.b16 %v1241, %v1240
    %v1734 = vpack.c.b16 %v1243, %v1242
    %v1735 = vpack.c.b16 %v1245, %v1244
    %v1736 = vpack.c.b16 %v1247, %v1246
    %v1737 = vpack.c.b16 %v1249, %v1248
    %v1738 = vpack.c.b16 %v1251, %v1250
    %v1739 = vpack.c.b16 %v1253, %v1252
    %v1740 = vpack.c.b16 %v1255, %v1254
    %v1741 = vpack.c.b16 %v1257, %v1256
    %v1742 = vpack.c.b16 %v1259, %v1258
    %v1743 = vpack.c.b16 %v1261, %v1260
    %v1744 = vpack.c.b16 %v1263, %v1262
    %v1745 = vpack.c.b16 %v1265, %v1264
    %v1746 = vpack.c.b16 %v1267, %v1266
    %v1747 = vpack.c.b16 %v1269, %v1268
    %v1748 = vpack.c.b16 %v1271, %v1270
    %v1749 = vpack.c.b16 %v1273, %v1272
    %v1750 = vpack.c.b16 %v1275, %v1274
    %v1751 = vpack.c.b16 %v1277, %v1276
    %v1752 = vpack.c.b16 %v1279, %v1278
    %v1753 = vpack.c.b16 %v1281, %v1280
    %v1754 = vpack.c.b16 %v1283, %v1282
    %v1755 = vpack.c.b16 %v1285, %v1284
    %v1756 = vpack.c.b16 %v1287, %v1286
    %v1757 = vpack.c.b16 %v1289, %v1288
    %v1758 = vpack.c.b16 %v1291, %v1290
    %v1759 = vpack.c.b16 %v1293, %v1292
    %v1760 = vpack.c.b16 %v1295, %v1294
    %v1761 = vpack.c.b16 %v1297, %v1296
    %v1762 = vpack.c.b16 %v1299, %v1298
    %v1763 = vpack.c.b16 %v1301, %v1300
    %v1764 = vpack.c.b16 %v1303, %v1302
    %v1765 = vpack.c.b16 %v1305, %v1304
    %v1766 = vpack.c.b16 %v1307, %v1306
    %v1767 = vpack.c.b16 %v1309, %v1308
    %v1768 = vpack.c.b16 %v1311, %v1310
    %v1769 = vpack.c.b16 %v1313, %v1312
    %v1770 = vpack.c.b16 %v1315, %v1314
    %v1771 = vpack.c.b16 %v1317, %v1316
    %v1772 = vpack.c.b16 %v1319, %v1318
    %v1773 = vpack.c.b16 %v1321, %v1320
    %v1774 = vpack.c.b16 %v1323, %v1322
    %v1775 = vpack.c.b16 %v1325, %v1324
    %v1776 = vpack.c.b16 %v1327, %v1326
    %v1777 = vpack.c.b16 %v1329, %v1328
    %v1778 = vpack.c.b16 %v1331, %v1330
    %v1779 = vpack.c.b16 %v1333, %v1332
    %v1780 = vpack.c.b16 %v1335, %v1334
    %v1781 = vpack.c.b16 %v1337, %v1336
    %v1782 = vpack.c.b16 %v1339, %v1338
    %v1783 = vpack.c.b16 %v1341, %v1340
    %v1784 = vpack.c.b16 %v1343, %v1342
    %v1785 = vpack.c.b16 %v1345, %v1344
    %v1786 = vpack.c.b16 %v1347, %v1346
    %v1787 = vpack.c.b16 %v1349, %v1348
    %v1788 = vpack.c.b16 %v1351, %v1350
    %v1789 = vpack.c.b16 %v1353, %v1352
    %v1790 = vpack.c.b16 %v1355, %v1354
    %v1791 = vpack.c.b16 %v1357, %v1356
    %v1792 = vpack.c.b16 %v1359, %v1358
    %v1793 = vpack.c.b16 %v1361, %v1360
    %v1794 = vpack.c.b16 %v1363, %v1362
    %v1795 = vpack.c.b16 %v1365, %v1364
    %v1796 = vpack.c.b16 %v1367, %v1366
    %v1797 = vpack.c.b16 %v1369, %v1368
    %v1798 = vpack.c.b16 %v1371, %v1370
    %v1799 = vpack.c.b16 %v1373, %v1372
    %v1800 = vpack.c.b16 %v1375, %v1374
    %v1801 = vpack.c.b16 %v1377, %v1376
    %v1802 = vpack.c.b16 %v1379, %v1378
    %v1803 = vpack.c.b16 %v1381, %v1380
    %v1804 = vpack.c.b16 %v1383, %v1382
    %v1805 = vpack.c.b16 %v1385, %v1384
    %v1806 = vpack.c.b16 %v1387, %v1386
    %v1807 = vpack.c.b16 %v1389, %v1388
    %v1808 = vpack.c.b16 %v1391, %v1390
    %v1809 = vpack.c.b16 %v1393, %v1392
    %v1810 = vpack.c.b16 %v1395, %v1394
    %v1811 = vpack.c.b16 %v1397, %v1396
    %v1812 = vpack.c.b16 %v1399, %v1398
    %v1813 = vpack.c.b16 %v1401, %v1400
    %v1814 = vpack.c.b16 %v1403, %v1402
    %v1815 = vpack.c.b16 %v1405, %v1404
    %v1816 = vpack.c.b16 %v1407, %v1406
    %v1817 = vpack.c.b16 %v1409, %v1408
    %v1818 = vpack.c.b16 %v1411, %v1410
    %v1819 = vpack.c.b16 %v1413, %v1412
    %v1820 = vpack.c.b16 %v1415, %v1414
    %v1821 = vpack.c.b16 %v1417, %v1416
    %v1822 = vpack.c.b16 %v1419, %v1418
    %v1823 = vpack.c.b16 %v1421, %v1420
    %v1824 = vpack.c.b16 %v1423, %v1422
    %v1825 = vpack.c.b16 %v1425, %v1424
    %v1826 = vpack.c.b16 %v1427, %v1426
    %v1827 = vpack.c.b16 %v1429, %v1428
    %v1828 = vpack.c.b16 %v1431, %v1430
    %v1829 = vpack.c.b16 %v1433, %v1432
    %v1830 = vpack.c.b16 %v1435, %v1434
    %v1831 = vpack.c.b16 %v1437, %v1436
    %v1832 = vpack.c.b16 %v1439, %v1438
    %v1833 = vpack.c.b16 %v1441, %v1440
    %v1834 = vpack.c.b16 %v1443, %v1442
    %v1835 = vpack.c.b16 %v1445, %v1444
    %v1836 = vpack.c.b16 %v1447, %v1446
    %v1837 = vpack.c.b16 %v1449, %v1448
    %v1838 = vpack.c.b16 %v1451, %v1450
    %v1839 = vpack.c.b16 %v1453, %v1452
    %v1840 = vpack.c.b16 %v1455, %v1454
    %v1841 = vpack.c.b16 %v1457, %v1456
    %v1842 = vpack.c.b16 %v1459, %v1458
    %v1843 = vpack.c.b16 %v1461, %v1460
    %v1844 = vpack.c.b16 %v1463, %v1462
    %v1845 = vpack.c.b16 %v1465, %v1464
    %v1846 = vpack.c.b16 %v1467, %v1466
    %v1847 = vpack.c.b16 %v1469, %v1468
    %v1848 = vpack.c.b16 %v1471, %v1470
    %v1849 = vpack.c.b16 %v1473, %v1472
    %v1850 = vpack.c.b16 %v1475, %v1474
    %v1851 = vpack.c.b16 %v1477, %v1476
    %v1852 = vpack.c.b16 %v1479, %v1478
    %v1853 = vpack.c.b16 %v1481, %v1480
    %v1854 = vpack.c.b16 %v1483, %v1482
    %v1855 = vpack.c.b16 %v1485, %v1484
    %v1856 = vpack.c.b16 %v1487, %v1486
    %v1857 = vpack.c.b16 %v1489, %v1488
    %v1858 = vpack.c.b16 %v1491, %v1490
    %v1859 = vpack.c.b16 %v1493, %v1492
    %v1860 = vpack.c.b16 %v1495, %v1494
    %v1861 = vpack.c.b16 %v1497, %v1496
    %v1862 = vpack.c.b16 %v1499, %v1498
    %v1863 = vpack.c.b16 %v1501, %v1500
    %v1864 = vpack.c.b16 %v1503, %v1502
    %v1865 = vpack.c.b16 %v1505, %v1504
    %v1866 = vpack.c.b16 %v1507, %v1506
    %v1867 = vpack.c.b16 %v1509, %v1508
    %v1868 = vpack.c.b16 %v1511, %v1510
    %v1869 = vpack.c.b16 %v1513, %v1512
    %v1870 = vpack.c.b16 %v1515, %v1514
    %v1871 = vpack.c.b16 %v1517, %v1516
    %v1872 = vpack.c.b16 %v1519, %v1518
    %v1873 = vpack.c.b16 %v1521, %v1520
    %v1874 = vpack.c.b16 %v1523, %v1522
    %v1875 = vpack.c.b16 %v1525, %v1524
    %v1876 = vpack.c.b16 %v1527, %v1526
    %v1877 = vpack.c.b16 %v1529, %v1528
    %v1878 = vpack.c.b16 %v1531, %v1530
    %v1879 = vpack.c.b16 %v1533, %v1532
    %v1880 = vpack.c.b16 %v1535, %v1534
    %v1881 = vpack.c.b16 %v1537, %v1536
    %v1882 = vpack.c.b16 %v1539, %v1538
    %v1883 = vpack.c.b16 %v1541, %v1540
    %v1884 = vpack.c.b16 %v1543, %v1542
    %v1885 = vpack.c.b16 %v1545, %v1544
    %v1886 = vpack.c.b16 %v1547, %v1546
    %v1887 = vpack.c.b16 %v1549, %v1548
    %v1888 = vpack.c.b16 %v1551, %v1550
    %v1889 = vpack.c.b16 %v1553, %v1552
    %v1890 = vpack.c.b16 %v1555, %v1554
    %v1891 = vpack.c.b16 %v1557, %v1556
    %v1892 = vpack.c.b16 %v1559, %v1558
    %v1893 = vpack.c.b16 %v1561, %v1560
    %v1894 = vpack.c.b16 %v1563, %v1562
    %v1895 = vpack.c.b16 %v1565, %v1564
    %v1896 = vpack.c.b16 %v1567, %v1566
    %v1897 = vpack.c.b16 %v1569, %v1568
    %v1898 = vpack.c.b16 %v1571, %v1570
    %v1899 = vpack.c.b16 %v1573, %v1572
    %v1900 = vpack.c.b16 %v1575, %v1574
    %v1901 = vpack.c.b16 %v1577, %v1576
    %v1902 = vpack.c.b16 %v1579, %v1578
    %v1903 = vpack.c.b16 %v1581, %v1580
    %v1904 = vpack.c.b16 %v1583, %v1582
    %v1905 = vpack.c.b16 %v1585, %v1584
    %v1906 = vpack.c.b16 %v1587, %v1586
    %v1907 = vpack.c.b16 %v1589, %v1588
    %v1908 = vpack.c.b16 %v1591, %v1590
    %v1909 = vpack.c.b16 %v1593, %v1592
    %v1910 = vpack.c.b16 %v1595, %v1594
    %v1911 = vpack.c.b16 %v1597, %v1596
    %v1912 = vpack.c.b16 %v1599, %v1598
    %v1913 = vpack.c.b16 %v1601, %v1600
    %v1914 = vpack.c.b16 %v1603, %v1602
    %v1915 = vpack.c.b16 %v1605, %v1604
    %v1916 = vpack.c.b16 %v1607, %v1606
    %v1917 = vpack.c.b16 %v1609, %v1608
    %v1918 = vpack.c.b16 %v1611, %v1610
    %v1919 = vpack.c.b16 %v1613, %v1612
    %v1920 = vpack.c.b16 %v1615, %v1614
    %v1921 = vpack.c.b16 %v1617, %v1616
    %v1922 = vpack.c.b16 %v1619, %v1618
    %v1923 = vpack.c.b16 %v1621, %v1620
    %v1924 = vpack.c.b16 %v1623, %v1622
    %v1925 = vpack.c.b16 %v1625, %v1624
    %v1926 = vpack.c.b16 %v1627, %v1626
    %v1927 = vpack.c.b16 %v1629, %v1628
    %v1928 = vpack.c.b16 %v1631, %v1630
    %v1929 = vpack.c.b16 %v1633, %v1632
    %v1930 = vpack.c.b16 %v1635, %v1634
    %v1931 = vpack.c.b16 %v1637, %v1636
    %v1932 = vpack.c.b16 %v1639, %v1638
    %v1933 = vpack.c.b16 %v1641, %v1640
    %v1934 = vpack.c.b16 %v1643, %v1642
    %v1935 = vpack.c.b16 %v1645, %v1644
    %v1936 = vpack.c.b16 %v1647, %v1646
    %v1937 = vpack.c.b16 %v1649, %v1648
    %v1938 = vpack.c.b16 %v1651, %v1650
    %v1939 = vpack.c.b16 %v1653, %v1652
    %v1940 = vpack.c.b16 %v1655, %v1654
    %v1941 = vpack.c.b16 %v1657, %v1656
    %v1942 = vpack.c.b16 %v1659, %v1658
    %v1943 = vpack.c.b16 %v1661, %v1660
    %v1944 = vpack.c.b16 %v1663, %v1662
    %v1945 = vpack.c.b16 %v1665, %v1664
    %v1946 = vpack.c.b16 %v1667, %v1666
    %v1947 = vpack.c.b16 %v1669, %v1668
    %v1948 = vpack.c.b16 %v1671, %v1670
    %v1949 = vpack.c.b16 %v1673, %v1672
    %v1950 = vpack.c.b16 %v1675, %v1674
    %v1951 = vpack.c.b16 %v1677, %v1676
    %v1952 = vpack.c.b16 %v1679, %v1678
    %v1953 = vpack.c.b16 %v1681, %v1680
    %v1954 = vpack.c.b16 %v1683, %v1682
    %v1955 = vpack.c.b16 %v1685, %v1684
    %v1956 = vpack.c.b16 %v1687, %v1686
    %v1957 = vpack.c.b16 %v1689, %v1688
    %v1958 = vpack.c.b16 %v1691, %v1690
    %v1959 = vpack.c.b16 %v1693, %v1692
    %v1960 = vpack.c.b16 %v1695, %v1694
    %v1961 = vpack.c.b16 %v1697, %v1696
    %v1962 = vpack.c.b16 %v1699, %v1698
    %v1963 = vpack.c.b16 %v1701, %v1700
    %v1964 = vpack.c.b16 %v1703, %v1702
    %v1965 = vpack.c.b16 %v1705, %v1704
    %v1966 = vpack.c.b16 %v1707, %v1706
    %v1967 = vpack.c.b16 %v1709, %v1708
    %v1968 = vpack.c.b16 %v1711, %v1710
    %v1969 = vpack.c.b16 %v1713, %v1712
    %2226 = vmatprep.subr.bf16.mxu0 0
    %2227 = vmatpush1.bf16.msra.mxu0 %v1714
    %2228 = vmatprep.subr.bf16.mxu0 0
    %2229 = vmatpush1.bf16.msra.mxu0 %v1715
    %2230 = vmatprep.subr.bf16.mxu0 0
    %2231 = vmatpush1.bf16.msra.mxu0 %v1716
    %2232 = vmatprep.subr.bf16.mxu0 0
    %2233 = vmatpush1.bf16.msra.mxu0 %v1717
    %2234 = vmatprep.subr.bf16.mxu0 0
    %2235 = vmatpush1.bf16.msra.mxu0 %v1718
    %2236 = vmatprep.subr.bf16.mxu0 0
    %2237 = vmatpush1.bf16.msra.mxu0 %v1719
    %2238 = vmatprep.subr.bf16.mxu0 0
    %2239 = vmatpush1.bf16.msra.mxu0 %v1720
    %2240 = vmatprep.subr.bf16.mxu0 0
    %2241 = vmatpush1.bf16.msra.mxu0 %v1721
    %2242 = vmatprep.subr.bf16.mxu0 0
    %2243 = vmatpush1.bf16.msra.mxu0 %v1722
    %2244 = vmatprep.subr.bf16.mxu0 0
    %2245 = vmatpush1.bf16.msra.mxu0 %v1723
    %2246 = vmatprep.subr.bf16.mxu0 0
    %2247 = vmatpush1.bf16.msra.mxu0 %v1724
    %2248 = vmatprep.subr.bf16.mxu0 0
    %2249 = vmatpush1.bf16.msra.mxu0 %v1725
    %2250 = vmatprep.subr.bf16.mxu0 0
    %2251 = vmatpush1.bf16.msra.mxu0 %v1726
    %2252 = vmatprep.subr.bf16.mxu0 0
    %2253 = vmatpush1.bf16.msra.mxu0 %v1727
    %2254 = vmatprep.subr.bf16.mxu0 0
    %2255 = vmatpush1.bf16.msra.mxu0 %v1728
    %2256 = vmatprep.subr.bf16.mxu0 0
    %2257 = vmatpush1.bf16.msra.mxu0 %v1729
    %2258 = vmatprep.mubr.bf16.mxu0 %v142
    %2259 = vmatmul.mubr.bf16.gmra.mrb[0].mxu0 %v141
    %v2260 = vpop.f32.mrb[0].mxu0
    %v2261 = vadd.f32 %v689, %v2260
    %v2262 = vpop.f32.mrb[0].mxu0
    %v2263 = vpop.f32.mrb[0].mxu0
    %v2264 = vadd.f32 %v689, %v2263
    %v2265 = vpop.f32.mrb[0].mxu0
    %2266 = vdwg.mxu0
    %2267 = vmatprep.subr.bf16.mxu0 0
    %2268 = vmatpush1.bf16.msra.mxu0 %v1730
    %2269 = vmatprep.subr.bf16.mxu0 0
    %2270 = vmatpush1.bf16.msra.mxu0 %v1731
    %2271 = vmatprep.subr.bf16.mxu0 0
    %2272 = vmatpush1.bf16.msra.mxu0 %v1732
    %2273 = vmatprep.subr.bf16.mxu0 0
    %2274 = vmatpush1.bf16.msra.mxu0 %v1733
    %2275 = vmatprep.subr.bf16.mxu0 0
    %2276 = vmatpush1.bf16.msra.mxu0 %v1734
    %2277 = vmatprep.subr.bf16.mxu0 0
    %2278 = vmatpush1.bf16.msra.mxu0 %v1735
    %2279 = vmatprep.subr.bf16.mxu0 0
    %2280 = vmatpush1.bf16.msra.mxu0 %v1736
    %2281 = vmatprep.subr.bf16.mxu0 0
    %2282 = vmatpush1.bf16.msra.mxu0 %v1737
    %2283 = vmatprep.subr.bf16.mxu0 0
    %2284 = vmatpush1.bf16.msra.mxu0 %v1738
    %2285 = vmatprep.subr.bf16.mxu0 0
    %2286 = vmatpush1.bf16.msra.mxu0 %v1739
    %2287 = vmatprep.subr.bf16.mxu0 0
    %2288 = vmatpush1.bf16.msra.mxu0 %v1740
    %2289 = vmatprep.subr.bf16.mxu0 0
    %2290 = vmatpush1.bf16.msra.mxu0 %v1741
    %2291 = vmatprep.subr.bf16.mxu0 0
    %2292 = vmatpush1.bf16.msra.mxu0 %v1742
    %2293 = vmatprep.subr.bf16.mxu0 0
    %2294 = vmatpush1.bf16.msra.mxu0 %v1743
    %2295 = vmatprep.subr.bf16.mxu0 0
    %2296 = vmatpush1.bf16.msra.mxu0 %v1744
    %2297 = vmatprep.subr.bf16.mxu0 0
    %2298 = vmatpush1.bf16.msra.mxu0 %v1745
    %2299 = vmatprep.mubr.bf16.mxu0 %v144
    %2300 = vmatmul.mubr.bf16.gmra.mrb[0].mxu0 %v143
    %v2301 = vpop.f32.mrb[0].mxu0
    %v2302 = vadd.f32 %v2261, %v2301
    %v2303 = vpop.f32.mrb[0].mxu0
    %v2304 = vpop.f32.mrb[0].mxu0
    %v2305 = vadd.f32 %v2264, %v2304
    %v2306 = vpop.f32.mrb[0].mxu0
    %2307 = vdwg.mxu0
    %2308 = vmatprep.subr.bf16.mxu0 0
    %2309 = vmatpush1.bf16.msra.mxu0 %v1746
    %2310 = vmatprep.subr.bf16.mxu0 0
    %2311 = vmatpush1.bf16.msra.mxu0 %v1747
    %2312 = vmatprep.subr.bf16.mxu0 0
    %2313 = vmatpush1.bf16.msra.mxu0 %v1748
    %2314 = vmatprep.subr.bf16.mxu0 0
    %2315 = vmatpush1.bf16.msra.mxu0 %v1749
    %2316 = vmatprep.subr.bf16.mxu0 0
    %2317 = vmatpush1.bf16.msra.mxu0 %v1750
    %2318 = vmatprep.subr.bf16.mxu0 0
    %2319 = vmatpush1.bf16.msra.mxu0 %v1751
    %2320 = vmatprep.subr.bf16.mxu0 0
    %2321 = vmatpush1.bf16.msra.mxu0 %v1752
    %2322 = vmatprep.subr.bf16.mxu0 0
    %2323 = vmatpush1.bf16.msra.mxu0 %v1753
    %2324 = vmatprep.subr.bf16.mxu0 0
    %2325 = vmatpush1.bf16.msra.mxu0 %v1754
    %2326 = vmatprep.subr.bf16.mxu0 0
    %2327 = vmatpush1.bf16.msra.mxu0 %v1755
    %2328 = vmatprep.subr.bf16.mxu0 0
    %2329 = vmatpush1.bf16.msra.mxu0 %v1756
    %2330 = vmatprep.subr.bf16.mxu0 0
    %2331 = vmatpush1.bf16.msra.mxu0 %v1757
    %2332 = vmatprep.subr.bf16.mxu0 0
    %2333 = vmatpush1.bf16.msra.mxu0 %v1758
    %2334 = vmatprep.subr.bf16.mxu0 0
    %2335 = vmatpush1.bf16.msra.mxu0 %v1759
    %2336 = vmatprep.subr.bf16.mxu0 0
    %2337 = vmatpush1.bf16.msra.mxu0 %v1760
    %2338 = vmatprep.subr.bf16.mxu0 0
    %2339 = vmatpush1.bf16.msra.mxu0 %v1761
    %2340 = vmatprep.mubr.bf16.mxu0 %v146
    %2341 = vmatmul.mubr.bf16.gmra.mrb[0].mxu0 %v145
    %v2342 = vpop.f32.mrb[0].mxu0
    %v2343 = vadd.f32 %v2302, %v2342
    %v2344 = vpop.f32.mrb[0].mxu0
    %v2345 = vpop.f32.mrb[0].mxu0
    %v2346 = vadd.f32 %v2305, %v2345
    %v2347 = vpop.f32.mrb[0].mxu0
    %2348 = vdwg.mxu0
    %2349 = vmatprep.subr.bf16.mxu0 0
    %2350 = vmatpush1.bf16.msra.mxu0 %v1762
    %2351 = vmatprep.subr.bf16.mxu0 0
    %2352 = vmatpush1.bf16.msra.mxu0 %v1763
    %2353 = vmatprep.subr.bf16.mxu0 0
    %2354 = vmatpush1.bf16.msra.mxu0 %v1764
    %2355 = vmatprep.subr.bf16.mxu0 0
    %2356 = vmatpush1.bf16.msra.mxu0 %v1765
    %2357 = vmatprep.subr.bf16.mxu0 0
    %2358 = vmatpush1.bf16.msra.mxu0 %v1766
    %2359 = vmatprep.subr.bf16.mxu0 0
    %2360 = vmatpush1.bf16.msra.mxu0 %v1767
    %2361 = vmatprep.subr.bf16.mxu0 0
    %2362 = vmatpush1.bf16.msra.mxu0 %v1768
    %2363 = vmatprep.subr.bf16.mxu0 0
    %2364 = vmatpush1.bf16.msra.mxu0 %v1769
    %2365 = vmatprep.subr.bf16.mxu0 0
    %2366 = vmatpush1.bf16.msra.mxu0 %v1770
    %2367 = vmatprep.subr.bf16.mxu0 0
    %2368 = vmatpush1.bf16.msra.mxu0 %v1771
    %2369 = vmatprep.subr.bf16.mxu0 0
    %2370 = vmatpush1.bf16.msra.mxu0 %v1772
    %2371 = vmatprep.subr.bf16.mxu0 0
    %2372 = vmatpush1.bf16.msra.mxu0 %v1773
    %2373 = vmatprep.subr.bf16.mxu0 0
    %2374 = vmatpush1.bf16.msra.mxu0 %v1774
    %2375 = vmatprep.subr.bf16.mxu0 0
    %2376 = vmatpush1.bf16.msra.mxu0 %v1775
    %2377 = vmatprep.subr.bf16.mxu0 0
    %2378 = vmatpush1.bf16.msra.mxu0 %v1776
    %2379 = vmatprep.subr.bf16.mxu0 0
    %2380 = vmatpush1.bf16.msra.mxu0 %v1777
    %2381 = vmatprep.mubr.bf16.mxu0 %v148
    %2382 = vmatmul.mubr.bf16.gmra.mrb[0].mxu0 %v147
    %v2383 = vpop.f32.mrb[0].mxu0
    %v2384 = vadd.f32 %v2343, %v2383
    %v2385 = vpop.f32.mrb[0].mxu0
    %v2386 = vpop.f32.mrb[0].mxu0
    %v2387 = vadd.f32 %v2346, %v2386
    %v2388 = vpop.f32.mrb[0].mxu0
    %2389 = vdwg.mxu0
    %2390 = vmatprep.subr.bf16.mxu0 0
    %2391 = vmatpush1.bf16.msra.mxu0 %v1778
    %2392 = vmatprep.subr.bf16.mxu0 0
    %2393 = vmatpush1.bf16.msra.mxu0 %v1779
    %2394 = vmatprep.subr.bf16.mxu0 0
    %2395 = vmatpush1.bf16.msra.mxu0 %v1780
    %2396 = vmatprep.subr.bf16.mxu0 0
    %2397 = vmatpush1.bf16.msra.mxu0 %v1781
    %2398 = vmatprep.subr.bf16.mxu0 0
    %2399 = vmatpush1.bf16.msra.mxu0 %v1782
    %2400 = vmatprep.subr.bf16.mxu0 0
    %2401 = vmatpush1.bf16.msra.mxu0 %v1783
    %2402 = vmatprep.subr.bf16.mxu0 0
    %2403 = vmatpush1.bf16.msra.mxu0 %v1784
    %2404 = vmatprep.subr.bf16.mxu0 0
    %2405 = vmatpush1.bf16.msra.mxu0 %v1785
    %2406 = vmatprep.subr.bf16.mxu0 0
    %2407 = vmatpush1.bf16.msra.mxu0 %v1786
    %2408 = vmatprep.subr.bf16.mxu0 0
    %2409 = vmatpush1.bf16.msra.mxu0 %v1787
    %2410 = vmatprep.subr.bf16.mxu0 0
    %2411 = vmatpush1.bf16.msra.mxu0 %v1788
    %2412 = vmatprep.subr.bf16.mxu0 0
    %2413 = vmatpush1.bf16.msra.mxu0 %v1789
    %2414 = vmatprep.subr.bf16.mxu0 0
    %2415 = vmatpush1.bf16.msra.mxu0 %v1790
    %2416 = vmatprep.subr.bf16.mxu0 0
    %2417 = vmatpush1.bf16.msra.mxu0 %v1791
    %2418 = vmatprep.subr.bf16.mxu0 0
    %2419 = vmatpush1.bf16.msra.mxu0 %v1792
    %2420 = vmatprep.subr.bf16.mxu0 0
    %2421 = vmatpush1.bf16.msra.mxu0 %v1793
    %2422 = vmatprep.mubr.bf16.mxu0 %v150
    %2423 = vmatmul.mubr.bf16.gmra.mrb[0].mxu0 %v149
    %v2424 = vpop.f32.mrb[0].mxu0
    %v2425 = vadd.f32 %v2384, %v2424
    %v2426 = vpop.f32.mrb[0].mxu0
    %v2427 = vpop.f32.mrb[0].mxu0
    %v2428 = vadd.f32 %v2387, %v2427
    %v2429 = vpop.f32.mrb[0].mxu0
    %2430 = vdwg.mxu0
    %2431 = vmatprep.subr.bf16.mxu0 0
    %2432 = vmatpush1.bf16.msra.mxu0 %v1794
    %2433 = vmatprep.subr.bf16.mxu0 0
    %2434 = vmatpush1.bf16.msra.mxu0 %v1795
    %2435 = vmatprep.subr.bf16.mxu0 0
    %2436 = vmatpush1.bf16.msra.mxu0 %v1796
    %2437 = vmatprep.subr.bf16.mxu0 0
    %2438 = vmatpush1.bf16.msra.mxu0 %v1797
    %2439 = vmatprep.subr.bf16.mxu0 0
    %2440 = vmatpush1.bf16.msra.mxu0 %v1798
    %2441 = vmatprep.subr.bf16.mxu0 0
    %2442 = vmatpush1.bf16.msra.mxu0 %v1799
    %2443 = vmatprep.subr.bf16.mxu0 0
    %2444 = vmatpush1.bf16.msra.mxu0 %v1800
    %2445 = vmatprep.subr.bf16.mxu0 0
    %2446 = vmatpush1.bf16.msra.mxu0 %v1801
    %2447 = vmatprep.subr.bf16.mxu0 0
    %2448 = vmatpush1.bf16.msra.mxu0 %v1802
    %2449 = vmatprep.subr.bf16.mxu0 0
    %2450 = vmatpush1.bf16.msra.mxu0 %v1803
    %2451 = vmatprep.subr.bf16.mxu0 0
    %2452 = vmatpush1.bf16.msra.mxu0 %v1804
    %2453 = vmatprep.subr.bf16.mxu0 0
    %2454 = vmatpush1.bf16.msra.mxu0 %v1805
    %2455 = vmatprep.subr.bf16.mxu0 0
    %2456 = vmatpush1.bf16.msra.mxu0 %v1806
    %2457 = vmatprep.subr.bf16.mxu0 0
    %2458 = vmatpush1.bf16.msra.mxu0 %v1807
    %2459 = vmatprep.subr.bf16.mxu0 0
    %2460 = vmatpush1.bf16.msra.mxu0 %v1808
    %2461 = vmatprep.subr.bf16.mxu0 0
    %2462 = vmatpush1.bf16.msra.mxu0 %v1809
    %2463 = vmatprep.mubr.bf16.mxu0 %v152
    %2464 = vmatmul.mubr.bf16.gmra.mrb[0].mxu0 %v151
    %v2465 = vpop.f32.mrb[0].mxu0
    %v2466 = vadd.f32 %v2425, %v2465
    %v2467 = vpop.f32.mrb[0].mxu0
    %v2468 = vpop.f32.mrb[0].mxu0
    %v2469 = vadd.f32 %v2428, %v2468
    %v2470 = vpop.f32.mrb[0].mxu0
    %2471 = vdwg.mxu0
    %2472 = vmatprep.subr.bf16.mxu0 0
    %2473 = vmatpush1.bf16.msra.mxu0 %v1810
    %2474 = vmatprep.subr.bf16.mxu0 0
    %2475 = vmatpush1.bf16.msra.mxu0 %v1811
    %2476 = vmatprep.subr.bf16.mxu0 0
    %2477 = vmatpush1.bf16.msra.mxu0 %v1812
    %2478 = vmatprep.subr.bf16.mxu0 0
    %2479 = vmatpush1.bf16.msra.mxu0 %v1813
    %2480 = vmatprep.subr.bf16.mxu0 0
    %2481 = vmatpush1.bf16.msra.mxu0 %v1814
    %2482 = vmatprep.subr.bf16.mxu0 0
    %2483 = vmatpush1.bf16.msra.mxu0 %v1815
    %2484 = vmatprep.subr.bf16.mxu0 0
    %2485 = vmatpush1.bf16.msra.mxu0 %v1816
    %2486 = vmatprep.subr.bf16.mxu0 0
    %2487 = vmatpush1.bf16.msra.mxu0 %v1817
    %2488 = vmatprep.subr.bf16.mxu0 0
    %2489 = vmatpush1.bf16.msra.mxu0 %v1818
    %2490 = vmatprep.subr.bf16.mxu0 0
    %2491 = vmatpush1.bf16.msra.mxu0 %v1819
    %2492 = vmatprep.subr.bf16.mxu0 0
    %2493 = vmatpush1.bf16.msra.mxu0 %v1820
    %2494 = vmatprep.subr.bf16.mxu0 0
    %2495 = vmatpush1.bf16.msra.mxu0 %v1821
    %2496 = vmatprep.subr.bf16.mxu0 0
    %2497 = vmatpush1.bf16.msra.mxu0 %v1822
    %2498 = vmatprep.subr.bf16.mxu0 0
    %2499 = vmatpush1.bf16.msra.mxu0 %v1823
    %2500 = vmatprep.subr.bf16.mxu0 0
    %2501 = vmatpush1.bf16.msra.mxu0 %v1824
    %2502 = vmatprep.subr.bf16.mxu0 0
    %2503 = vmatpush1.bf16.msra.mxu0 %v1825
    %2504 = vmatprep.mubr.bf16.mxu0 %v154
    %2505 = vmatmul.mubr.bf16.gmra.mrb[0].mxu0 %v153
    %v2506 = vpop.f32.mrb[0].mxu0
    %v2507 = vadd.f32 %v2466, %v2506
    %v2508 = vpop.f32.mrb[0].mxu0
    %v2509 = vpop.f32.mrb[0].mxu0
    %v2510 = vadd.f32 %v2469, %v2509
    %v2511 = vpop.f32.mrb[0].mxu0
    %2512 = vdwg.mxu0
    %2513 = vmatprep.subr.bf16.mxu0 0
    %2514 = vmatpush1.bf16.msra.mxu0 %v1826
    %2515 = vmatprep.subr.bf16.mxu0 0
    %2516 = vmatpush1.bf16.msra.mxu0 %v1827
    %2517 = vmatprep.subr.bf16.mxu0 0
    %2518 = vmatpush1.bf16.msra.mxu0 %v1828
    %2519 = vmatprep.subr.bf16.mxu0 0
    %2520 = vmatpush1.bf16.msra.mxu0 %v1829
    %2521 = vmatprep.subr.bf16.mxu0 0
    %2522 = vmatpush1.bf16.msra.mxu0 %v1830
    %2523 = vmatprep.subr.bf16.mxu0 0
    %2524 = vmatpush1.bf16.msra.mxu0 %v1831
    %2525 = vmatprep.subr.bf16.mxu0 0
    %2526 = vmatpush1.bf16.msra.mxu0 %v1832
    %2527 = vmatprep.subr.bf16.mxu0 0
    %2528 = vmatpush1.bf16.msra.mxu0 %v1833
    %2529 = vmatprep.subr.bf16.mxu0 0
    %2530 = vmatpush1.bf16.msra.mxu0 %v1834
    %2531 = vmatprep.subr.bf16.mxu0 0
    %2532 = vmatpush1.bf16.msra.mxu0 %v1835
    %2533 = vmatprep.subr.bf16.mxu0 0
    %2534 = vmatpush1.bf16.msra.mxu0 %v1836
    %2535 = vmatprep.subr.bf16.mxu0 0
    %2536 = vmatpush1.bf16.msra.mxu0 %v1837
    %2537 = vmatprep.subr.bf16.mxu0 0
    %2538 = vmatpush1.bf16.msra.mxu0 %v1838
    %2539 = vmatprep.subr.bf16.mxu0 0
    %2540 = vmatpush1.bf16.msra.mxu0 %v1839
    %2541 = vmatprep.subr.bf16.mxu0 0
    %2542 = vmatpush1.bf16.msra.mxu0 %v1840
    %2543 = vmatprep.subr.bf16.mxu0 0
    %2544 = vmatpush1.bf16.msra.mxu0 %v1841
    %2545 = vmatprep.mubr.bf16.mxu0 %v156
    %2546 = vmatmul.mubr.bf16.gmra.mrb[0].mxu0 %v155
    %v2547 = vpop.f32.mrb[0].mxu0
    %v2548 = vadd.f32 %v2507, %v2547
    %v2549 = vpop.f32.mrb[0].mxu0
    %v2550 = vpop.f32.mrb[0].mxu0
    %v2551 = vadd.f32 %v2510, %v2550
    %v2552 = vpop.f32.mrb[0].mxu0
    %2553 = vdwg.mxu0
    %2554 = vmatprep.subr.bf16.mxu0 0
    %2555 = vmatpush1.bf16.msra.mxu0 %v1842
    %2556 = vmatprep.subr.bf16.mxu0 0
    %2557 = vmatpush1.bf16.msra.mxu0 %v1843
    %2558 = vmatprep.subr.bf16.mxu0 0
    %2559 = vmatpush1.bf16.msra.mxu0 %v1844
    %2560 = vmatprep.subr.bf16.mxu0 0
    %2561 = vmatpush1.bf16.msra.mxu0 %v1845
    %2562 = vmatprep.subr.bf16.mxu0 0
    %2563 = vmatpush1.bf16.msra.mxu0 %v1846
    %2564 = vmatprep.subr.bf16.mxu0 0
    %2565 = vmatpush1.bf16.msra.mxu0 %v1847
    %2566 = vmatprep.subr.bf16.mxu0 0
    %2567 = vmatpush1.bf16.msra.mxu0 %v1848
    %2568 = vmatprep.subr.bf16.mxu0 0
    %2569 = vmatpush1.bf16.msra.mxu0 %v1849
    %2570 = vmatprep.subr.bf16.mxu0 0
    %2571 = vmatpush1.bf16.msra.mxu0 %v1850
    %2572 = vmatprep.subr.bf16.mxu0 0
    %2573 = vmatpush1.bf16.msra.mxu0 %v1851
    %2574 = vmatprep.subr.bf16.mxu0 0
    %2575 = vmatpush1.bf16.msra.mxu0 %v1852
    %2576 = vmatprep.subr.bf16.mxu0 0
    %2577 = vmatpush1.bf16.msra.mxu0 %v1853
    %2578 = vmatprep.subr.bf16.mxu0 0
    %2579 = vmatpush1.bf16.msra.mxu0 %v1854
    %2580 = vmatprep.subr.bf16.mxu0 0
    %2581 = vmatpush1.bf16.msra.mxu0 %v1855
    %2582 = vmatprep.subr.bf16.mxu0 0
    %2583 = vmatpush1.bf16.msra.mxu0 %v1856
    %2584 = vmatprep.subr.bf16.mxu0 0
    %2585 = vmatpush1.bf16.msra.mxu0 %v1857
    %2586 = vmatprep.mubr.bf16.mxu0 %v158
    %2587 = vmatmul.mubr.bf16.gmra.mrb[0].mxu0 %v157
    %v2588 = vpop.f32.mrb[0].mxu0
    %v2589 = vadd.f32 %v2548, %v2588
    %v2590 = vpop.f32.mrb[0].mxu0
    %v2591 = vpop.f32.mrb[0].mxu0
    %v2592 = vadd.f32 %v2551, %v2591
    %v2593 = vpop.f32.mrb[0].mxu0
    %2594 = vdwg.mxu0
    %2595 = vmatprep.subr.bf16.mxu0 0
    %2596 = vmatpush1.bf16.msra.mxu0 %v1858
    %2597 = vmatprep.subr.bf16.mxu0 0
    %2598 = vmatpush1.bf16.msra.mxu0 %v1859
    %2599 = vmatprep.subr.bf16.mxu0 0
    %2600 = vmatpush1.bf16.msra.mxu0 %v1860
    %2601 = vmatprep.subr.bf16.mxu0 0
    %2602 = vmatpush1.bf16.msra.mxu0 %v1861
    %2603 = vmatprep.subr.bf16.mxu0 0
    %2604 = vmatpush1.bf16.msra.mxu0 %v1862
    %2605 = vmatprep.subr.bf16.mxu0 0
    %2606 = vmatpush1.bf16.msra.mxu0 %v1863
    %2607 = vmatprep.subr.bf16.mxu0 0
    %2608 = vmatpush1.bf16.msra.mxu0 %v1864
    %2609 = vmatprep.subr.bf16.mxu0 0
    %2610 = vmatpush1.bf16.msra.mxu0 %v1865
    %2611 = vmatprep.subr.bf16.mxu0 0
    %2612 = vmatpush1.bf16.msra.mxu0 %v1866
    %2613 = vmatprep.subr.bf16.mxu0 0
    %2614 = vmatpush1.bf16.msra.mxu0 %v1867
    %2615 = vmatprep.subr.bf16.mxu0 0
    %2616 = vmatpush1.bf16.msra.mxu0 %v1868
    %2617 = vmatprep.subr.bf16.mxu0 0
    %2618 = vmatpush1.bf16.msra.mxu0 %v1869
    %2619 = vmatprep.subr.bf16.mxu0 0
    %2620 = vmatpush1.bf16.msra.mxu0 %v1870
    %2621 = vmatprep.subr.bf16.mxu0 0
    %2622 = vmatpush1.bf16.msra.mxu0 %v1871
    %2623 = vmatprep.subr.bf16.mxu0 0
    %2624 = vmatpush1.bf16.msra.mxu0 %v1872
    %2625 = vmatprep.subr.bf16.mxu0 0
    %2626 = vmatpush1.bf16.msra.mxu0 %v1873
    %2627 = vmatprep.mubr.bf16.mxu0 %v160
    %2628 = vmatmul.mubr.bf16.gmra.mrb[0].mxu0 %v159
    %v2629 = vpop.f32.mrb[0].mxu0
    %v2630 = vadd.f32 %v2589, %v2629
    %v2631 = vpop.f32.mrb[0].mxu0
    %v2632 = vpop.f32.mrb[0].mxu0
    %v2633 = vadd.f32 %v2592, %v2632
    %v2634 = vpop.f32.mrb[0].mxu0
    %2635 = vdwg.mxu0
    %2636 = vmatprep.subr.bf16.mxu0 0
    %2637 = vmatpush1.bf16.msra.mxu0 %v1874
    %2638 = vmatprep.subr.bf16.mxu0 0
    %2639 = vmatpush1.bf16.msra.mxu0 %v1875
    %2640 = vmatprep.subr.bf16.mxu0 0
    %2641 = vmatpush1.bf16.msra.mxu0 %v1876
    %2642 = vmatprep.subr.bf16.mxu0 0
    %2643 = vmatpush1.bf16.msra.mxu0 %v1877
    %2644 = vmatprep.subr.bf16.mxu0 0
    %2645 = vmatpush1.bf16.msra.mxu0 %v1878
    %2646 = vmatprep.subr.bf16.mxu0 0
    %2647 = vmatpush1.bf16.msra.mxu0 %v1879
    %2648 = vmatprep.subr.bf16.mxu0 0
    %2649 = vmatpush1.bf16.msra.mxu0 %v1880
    %2650 = vmatprep.subr.bf16.mxu0 0
    %2651 = vmatpush1.bf16.msra.mxu0 %v1881
    %2652 = vmatprep.subr.bf16.mxu0 0
    %2653 = vmatpush1.bf16.msra.mxu0 %v1882
    %2654 = vmatprep.subr.bf16.mxu0 0
    %2655 = vmatpush1.bf16.msra.mxu0 %v1883
    %2656 = vmatprep.subr.bf16.mxu0 0
    %2657 = vmatpush1.bf16.msra.mxu0 %v1884
    %2658 = vmatprep.subr.bf16.mxu0 0
    %2659 = vmatpush1.bf16.msra.mxu0 %v1885
    %2660 = vmatprep.subr.bf16.mxu0 0
    %2661 = vmatpush1.bf16.msra.mxu0 %v1886
    %2662 = vmatprep.subr.bf16.mxu0 0
    %2663 = vmatpush1.bf16.msra.mxu0 %v1887
    %2664 = vmatprep.subr.bf16.mxu0 0
    %2665 = vmatpush1.bf16.msra.mxu0 %v1888
    %2666 = vmatprep.subr.bf16.mxu0 0
    %2667 = vmatpush1.bf16.msra.mxu0 %v1889
    %2668 = vmatprep.mubr.bf16.mxu0 %v162
    %2669 = vmatmul.mubr.bf16.gmra.mrb[0].mxu0 %v161
    %v2670 = vpop.f32.mrb[0].mxu0
    %v2671 = vadd.f32 %v2630, %v2670
    %v2672 = vpop.f32.mrb[0].mxu0
    %v2673 = vpop.f32.mrb[0].mxu0
    %v2674 = vadd.f32 %v2633, %v2673
    %v2675 = vpop.f32.mrb[0].mxu0
    %2676 = vdwg.mxu0
    %2677 = vmatprep.subr.bf16.mxu0 0
    %2678 = vmatpush1.bf16.msra.mxu0 %v1890
    %2679 = vmatprep.subr.bf16.mxu0 0
    %2680 = vmatpush1.bf16.msra.mxu0 %v1891
    %2681 = vmatprep.subr.bf16.mxu0 0
    %2682 = vmatpush1.bf16.msra.mxu0 %v1892
    %2683 = vmatprep.subr.bf16.mxu0 0
    %2684 = vmatpush1.bf16.msra.mxu0 %v1893
    %2685 = vmatprep.subr.bf16.mxu0 0
    %2686 = vmatpush1.bf16.msra.mxu0 %v1894
    %2687 = vmatprep.subr.bf16.mxu0 0
    %2688 = vmatpush1.bf16.msra.mxu0 %v1895
    %2689 = vmatprep.subr.bf16.mxu0 0
    %2690 = vmatpush1.bf16.msra.mxu0 %v1896
    %2691 = vmatprep.subr.bf16.mxu0 0
    %2692 = vmatpush1.bf16.msra.mxu0 %v1897
    %2693 = vmatprep.subr.bf16.mxu0 0
    %2694 = vmatpush1.bf16.msra.mxu0 %v1898
    %2695 = vmatprep.subr.bf16.mxu0 0
    %2696 = vmatpush1.bf16.msra.mxu0 %v1899
    %2697 = vmatprep.subr.bf16.mxu0 0
    %2698 = vmatpush1.bf16.msra.mxu0 %v1900
    %2699 = vmatprep.subr.bf16.mxu0 0
    %2700 = vmatpush1.bf16.msra.mxu0 %v1901
    %2701 = vmatprep.subr.bf16.mxu0 0
    %2702 = vmatpush1.bf16.msra.mxu0 %v1902
    %2703 = vmatprep.subr.bf16.mxu0 0
    %2704 = vmatpush1.bf16.msra.mxu0 %v1903
    %2705 = vmatprep.subr.bf16.mxu0 0
    %2706 = vmatpush1.bf16.msra.mxu0 %v1904
    %2707 = vmatprep.subr.bf16.mxu0 0
    %2708 = vmatpush1.bf16.msra.mxu0 %v1905
    %2709 = vmatprep.mubr.bf16.mxu0 %v164
    %2710 = vmatmul.mubr.bf16.gmra.mrb[0].mxu0 %v163
    %v2711 = vpop.f32.mrb[0].mxu0
    %v2712 = vadd.f32 %v2671, %v2711
    %v2713 = vpop.f32.mrb[0].mxu0
    %v2714 = vpop.f32.mrb[0].mxu0
    %v2715 = vadd.f32 %v2674, %v2714
    %v2716 = vpop.f32.mrb[0].mxu0
    %2717 = vdwg.mxu0
    %2718 = vmatprep.subr.bf16.mxu0 0
    %2719 = vmatpush1.bf16.msra.mxu0 %v1906
    %2720 = vmatprep.subr.bf16.mxu0 0
    %2721 = vmatpush1.bf16.msra.mxu0 %v1907
    %2722 = vmatprep.subr.bf16.mxu0 0
    %2723 = vmatpush1.bf16.msra.mxu0 %v1908
    %2724 = vmatprep.subr.bf16.mxu0 0
    %2725 = vmatpush1.bf16.msra.mxu0 %v1909
    %2726 = vmatprep.subr.bf16.mxu0 0
    %2727 = vmatpush1.bf16.msra.mxu0 %v1910
    %2728 = vmatprep.subr.bf16.mxu0 0
    %2729 = vmatpush1.bf16.msra.mxu0 %v1911
    %2730 = vmatprep.subr.bf16.mxu0 0
    %2731 = vmatpush1.bf16.msra.mxu0 %v1912
    %2732 = vmatprep.subr.bf16.mxu0 0
    %2733 = vmatpush1.bf16.msra.mxu0 %v1913
    %2734 = vmatprep.subr.bf16.mxu0 0
    %2735 = vmatpush1.bf16.msra.mxu0 %v1914
    %2736 = vmatprep.subr.bf16.mxu0 0
    %2737 = vmatpush1.bf16.msra.mxu0 %v1915
    %2738 = vmatprep.subr.bf16.mxu0 0
    %2739 = vmatpush1.bf16.msra.mxu0 %v1916
    %2740 = vmatprep.subr.bf16.mxu0 0
    %2741 = vmatpush1.bf16.msra.mxu0 %v1917
    %2742 = vmatprep.subr.bf16.mxu0 0
    %2743 = vmatpush1.bf16.msra.mxu0 %v1918
    %2744 = vmatprep.subr.bf16.mxu0 0
    %2745 = vmatpush1.bf16.msra.mxu0 %v1919
    %2746 = vmatprep.subr.bf16.mxu0 0
    %2747 = vmatpush1.bf16.msra.mxu0 %v1920
    %2748 = vmatprep.subr.bf16.mxu0 0
    %2749 = vmatpush1.bf16.msra.mxu0 %v1921
    %2750 = vmatprep.mubr.bf16.mxu0 %v166
    %2751 = vmatmul.mubr.bf16.gmra.mrb[0].mxu0 %v165
    %v2752 = vpop.f32.mrb[0].mxu0
    %v2753 = vadd.f32 %v2712, %v2752
    %v2754 = vpop.f32.mrb[0].mxu0
    %v2755 = vpop.f32.mrb[0].mxu0
    %v2756 = vadd.f32 %v2715, %v2755
    %v2757 = vpop.f32.mrb[0].mxu0
    %2758 = vdwg.mxu0
    %2759 = vmatprep.subr.bf16.mxu0 0
    %2760 = vmatpush1.bf16.msra.mxu0 %v1922
    %2761 = vmatprep.subr.bf16.mxu0 0
    %2762 = vmatpush1.bf16.msra.mxu0 %v1923
    %2763 = vmatprep.subr.bf16.mxu0 0
    %2764 = vmatpush1.bf16.msra.mxu0 %v1924
    %2765 = vmatprep.subr.bf16.mxu0 0
    %2766 = vmatpush1.bf16.msra.mxu0 %v1925
    %2767 = vmatprep.subr.bf16.mxu0 0
    %2768 = vmatpush1.bf16.msra.mxu0 %v1926
    %2769 = vmatprep.subr.bf16.mxu0 0
    %2770 = vmatpush1.bf16.msra.mxu0 %v1927
    %2771 = vmatprep.subr.bf16.mxu0 0
    %2772 = vmatpush1.bf16.msra.mxu0 %v1928
    %2773 = vmatprep.subr.bf16.mxu0 0
    %2774 = vmatpush1.bf16.msra.mxu0 %v1929
    %2775 = vmatprep.subr.bf16.mxu0 0
    %2776 = vmatpush1.bf16.msra.mxu0 %v1930
    %2777 = vmatprep.subr.bf16.mxu0 0
    %2778 = vmatpush1.bf16.msra.mxu0 %v1931
    %2779 = vmatprep.subr.bf16.mxu0 0
    %2780 = vmatpush1.bf16.msra.mxu0 %v1932
    %2781 = vmatprep.subr.bf16.mxu0 0
    %2782 = vmatpush1.bf16.msra.mxu0 %v1933
    %2783 = vmatprep.subr.bf16.mxu0 0
    %2784 = vmatpush1.bf16.msra.mxu0 %v1934
    %2785 = vmatprep.subr.bf16.mxu0 0
    %2786 = vmatpush1.bf16.msra.mxu0 %v1935
    %2787 = vmatprep.subr.bf16.mxu0 0
    %2788 = vmatpush1.bf16.msra.mxu0 %v1936
    %2789 = vmatprep.subr.bf16.mxu0 0
    %2790 = vmatpush1.bf16.msra.mxu0 %v1937
    %2791 = vmatprep.mubr.bf16.mxu0 %v168
    %2792 = vmatmul.mubr.bf16.gmra.mrb[0].mxu0 %v167
    %v2793 = vpop.f32.mrb[0].mxu0
    %v2794 = vadd.f32 %v2753, %v2793
    %v2795 = vpop.f32.mrb[0].mxu0
    %v2796 = vpop.f32.mrb[0].mxu0
    %v2797 = vadd.f32 %v2756, %v2796
    %v2798 = vpop.f32.mrb[0].mxu0
    %2799 = vdwg.mxu0
    %2800 = vmatprep.subr.bf16.mxu0 0
    %2801 = vmatpush1.bf16.msra.mxu0 %v1938
    %2802 = vmatprep.subr.bf16.mxu0 0
    %2803 = vmatpush1.bf16.msra.mxu0 %v1939
    %2804 = vmatprep.subr.bf16.mxu0 0
    %2805 = vmatpush1.bf16.msra.mxu0 %v1940
    %2806 = vmatprep.subr.bf16.mxu0 0
    %2807 = vmatpush1.bf16.msra.mxu0 %v1941
    %2808 = vmatprep.subr.bf16.mxu0 0
    %2809 = vmatpush1.bf16.msra.mxu0 %v1942
    %2810 = vmatprep.subr.bf16.mxu0 0
    %2811 = vmatpush1.bf16.msra.mxu0 %v1943
    %2812 = vmatprep.subr.bf16.mxu0 0
    %2813 = vmatpush1.bf16.msra.mxu0 %v1944
    %2814 = vmatprep.subr.bf16.mxu0 0
    %2815 = vmatpush1.bf16.msra.mxu0 %v1945
    %2816 = vmatprep.subr.bf16.mxu0 0
    %2817 = vmatpush1.bf16.msra.mxu0 %v1946
    %2818 = vmatprep.subr.bf16.mxu0 0
    %2819 = vmatpush1.bf16.msra.mxu0 %v1947
    %2820 = vmatprep.subr.bf16.mxu0 0
    %2821 = vmatpush1.bf16.msra.mxu0 %v1948
    %2822 = vmatprep.subr.bf16.mxu0 0
    %2823 = vmatpush1.bf16.msra.mxu0 %v1949
    %2824 = vmatprep.subr.bf16.mxu0 0
    %2825 = vmatpush1.bf16.msra.mxu0 %v1950
    %2826 = vmatprep.subr.bf16.mxu0 0
    %2827 = vmatpush1.bf16.msra.mxu0 %v1951
    %2828 = vmatprep.subr.bf16.mxu0 0
    %2829 = vmatpush1.bf16.msra.mxu0 %v1952
    %2830 = vmatprep.subr.bf16.mxu0 0
    %2831 = vmatpush1.bf16.msra.mxu0 %v1953
    %2832 = vmatprep.mubr.bf16.mxu0 %v170
    %2833 = vmatmul.mubr.bf16.gmra.mrb[0].mxu0 %v169
    %v2834 = vpop.f32.mrb[0].mxu0
    %v2835 = vadd.f32 %v2794, %v2834
    %v2836 = vpop.f32.mrb[0].mxu0
    %v2837 = vpop.f32.mrb[0].mxu0
    %v2838 = vadd.f32 %v2797, %v2837
    %v2839 = vpop.f32.mrb[0].mxu0
    %2840 = vdwg.mxu0
    %2841 = vmatprep.subr.bf16.mxu0 0
    %2842 = vmatpush1.bf16.msra.mxu0 %v1954
    %2843 = vmatprep.subr.bf16.mxu0 0
    %2844 = vmatpush1.bf16.msra.mxu0 %v1955
    %2845 = vmatprep.subr.bf16.mxu0 0
    %2846 = vmatpush1.bf16.msra.mxu0 %v1956
    %2847 = vmatprep.subr.bf16.mxu0 0
    %2848 = vmatpush1.bf16.msra.mxu0 %v1957
    %2849 = vmatprep.subr.bf16.mxu0 0
    %2850 = vmatpush1.bf16.msra.mxu0 %v1958
    %2851 = vmatprep.subr.bf16.mxu0 0
    %2852 = vmatpush1.bf16.msra.mxu0 %v1959
    %2853 = vmatprep.subr.bf16.mxu0 0
    %2854 = vmatpush1.bf16.msra.mxu0 %v1960
    %2855 = vmatprep.subr.bf16.mxu0 0
    %2856 = vmatpush1.bf16.msra.mxu0 %v1961
    %2857 = vmatprep.subr.bf16.mxu0 0
    %2858 = vmatpush1.bf16.msra.mxu0 %v1962
    %2859 = vmatprep.subr.bf16.mxu0 0
    %2860 = vmatpush1.bf16.msra.mxu0 %v1963
    %2861 = vmatprep.subr.bf16.mxu0 0
    %2862 = vmatpush1.bf16.msra.mxu0 %v1964
    %2863 = vmatprep.subr.bf16.mxu0 0
    %2864 = vmatpush1.bf16.msra.mxu0 %v1965
    %2865 = vmatprep.subr.bf16.mxu0 0
    %2866 = vmatpush1.bf16.msra.mxu0 %v1966
    %2867 = vmatprep.subr.bf16.mxu0 0
    %2868 = vmatpush1.bf16.msra.mxu0 %v1967
    %2869 = vmatprep.subr.bf16.mxu0 0
    %2870 = vmatpush1.bf16.msra.mxu0 %v1968
    %2871 = vmatprep.subr.bf16.mxu0 0
    %2872 = vmatpush1.bf16.msra.mxu0 %v1969
    %2873 = vmatprep.mubr.bf16.mxu0 %v172
    %2874 = vmatmul.mubr.bf16.gmra.mrb[0].mxu0 %v171
    %v2875 = vpop.f32.mrb[0].mxu0
    %v2876 = vadd.f32 %v2835, %v2875
    %v2877 = vpop.f32.mrb[0].mxu0
    %v2878 = vpop.f32.mrb[0].mxu0
    %v2879 = vadd.f32 %v2838, %v2878
    %v2880 = vpop.f32.mrb[0].mxu0
    %2881 = vdwg.mxu0
    %v2882 = vmax.f32 %v2876, 0.0
    %v2883 = vmax.f32 %v2879, 0.0
    %v2884 = vpack.c.bf16 %v2883, %v2882
    %v2885 = vld [vmem:[#allocation7] sm:$0xf]
    %v2886 = vld [vmem:[#allocation7 + $0x4] sm:$0xf]
    %v2887 = vld [vmem:[#allocation7 + $0x8] sm:$0xf]
    %v2888 = vld [vmem:[#allocation7 + $0xc] sm:$0xf]
    %v2889 = vld [vmem:[#allocation7 + $0x10] sm:$0xf]
    %v2890 = vld [vmem:[#allocation7 + $0x14] sm:$0xf]
    %v2891 = vld [vmem:[#allocation7 + $0x18] sm:$0xf]
    %v2892 = vld [vmem:[#allocation7 + $0x1c] sm:$0xf]
    %v2893 = vld [vmem:[#allocation7 + $0x20] sm:$0xf]
    %v2894 = vld [vmem:[#allocation7 + $0x24] sm:$0xf]
    %v2895 = vld [vmem:[#allocation7 + $0x28] sm:$0xf]
    %v2896 = vld [vmem:[#allocation7 + $0x2c] sm:$0xf]
    %v2897 = vld [vmem:[#allocation7 + $0x30] sm:$0xf]
    %v2898 = vld [vmem:[#allocation7 + $0x34] sm:$0xf]
    %v2899 = vld [vmem:[#allocation7 + $0x38] sm:$0xf]
    %v2900 = vld [vmem:[#allocation7 + $0x3c] sm:$0xf]
    %v2901 = vlaneseq
    %v2902 = vshrl.u32 %v2901, 7
    %v2903 = vsub.s32 1, %v2902
    %v2904 = vrot.slane %v173, %v2903
    %v2921 = vunpack.c.l.b16 %v2885
    %v2922 = vunpack.c.l.b16 %v2886
    %v2923 = vunpack.c.l.b16 %v2887
    %v2924 = vunpack.c.l.b16 %v2888
    %v2925 = vunpack.c.l.b16 %v2889
    %v2926 = vunpack.c.l.b16 %v2890
    %v2927 = vunpack.c.l.b16 %v2891
    %v2928 = vunpack.c.l.b16 %v2892
    %v2929 = vunpack.c.l.b16 %v2893
    %v2930 = vunpack.c.l.b16 %v2894
    %v2931 = vunpack.c.l.b16 %v2895
    %v2932 = vunpack.c.l.b16 %v2896
    %v2933 = vunpack.c.l.b16 %v2897
    %v2934 = vunpack.c.l.b16 %v2898
    %v2935 = vunpack.c.l.b16 %v2899
    %v2936 = vunpack.c.l.b16 %v2900
    %v2937 = vpack.c.b16 %v2922, %v2921
    %v2938 = vpack.c.b16 %v2924, %v2923
    %v2939 = vpack.c.b16 %v2926, %v2925
    %v2940 = vpack.c.b16 %v2928, %v2927
    %v2941 = vpack.c.b16 %v2930, %v2929
    %v2942 = vpack.c.b16 %v2932, %v2931
    %v2943 = vpack.c.b16 %v2934, %v2933
    %v2944 = vpack.c.b16 %v2936, %v2935
    %2953 = vmatprep.subr.bf16.mxu0 0
    %2954 = vmatpush1.bf16.msra.mxu0 %v2937
    %2955 = vmatprep.subr.bf16.mxu0 0
    %2956 = vmatpush1.bf16.msra.mxu0 %v2938
    %2957 = vmatprep.subr.bf16.mxu0 0
    %2958 = vmatpush1.bf16.msra.mxu0 %v2939
    %2959 = vmatprep.subr.bf16.mxu0 0
    %2960 = vmatpush1.bf16.msra.mxu0 %v2940
    %2961 = vmatprep.subr.bf16.mxu0 0
    %2962 = vmatpush1.bf16.msra.mxu0 %v2941
    %2963 = vmatprep.subr.bf16.mxu0 0
    %2964 = vmatpush1.bf16.msra.mxu0 %v2942
    %2965 = vmatprep.subr.bf16.mxu0 0
    %2966 = vmatpush1.bf16.msra.mxu0 %v2943
    %2967 = vmatprep.subr.bf16.mxu0 0
    %2968 = vmatpush1.bf16.msra.mxu0 %v2944
    %2969 = vmatprep.subr.bf16.mxu0 0
    %2970 = vmatpush1.bf16.msra.mxu0 0
    %2971 = vmatprep.subr.bf16.mxu0 0
    %2972 = vmatpush1.bf16.msra.mxu0 0
    %2973 = vmatprep.subr.bf16.mxu0 0
    %2974 = vmatpush1.bf16.msra.mxu0 0
    %2975 = vmatprep.subr.bf16.mxu0 0
    %2976 = vmatpush1.bf16.msra.mxu0 0
    %2977 = vmatprep.subr.bf16.mxu0 0
    %2978 = vmatpush1.bf16.msra.mxu0 0
    %2979 = vmatprep.subr.bf16.mxu0 0
    %2980 = vmatpush1.bf16.msra.mxu0 0
    %2981 = vmatprep.subr.bf16.mxu0 0
    %2982 = vmatpush1.bf16.msra.mxu0 0
    %2983 = vmatprep.subr.bf16.mxu0 0
    %2984 = vmatpush1.bf16.msra.mxu0 0
    %2985 = vmatprep.mubr.bf16.mxu0 0
    %2986 = vmatmul.mubr.bf16.gmra.mrb[0].mxu0 %v2884
    %v2987 = vpop.f32.mrb[0].mxu0
    %v2988 = vadd.f32 %v2904, %v2987
    %v2989 = vpop.f32.mrb[0].mxu0
    %v2990 = vpop.f32.mrb[0].mxu0
    %v2991 = vadd.f32 %v2904, %v2990
    %v2992 = vpop.f32.mrb[0].mxu0
    %2993 = vdwg.mxu0
    %v2994 = vmax.f32 %v2988, 0.0
    %v2995 = vmax.f32 %v2991, 0.0
    %v2996 = vpack.c.bf16 %v2995, %v2994
    %v2997 = vld [vmem:[#allocation8] sm:$0xf]
    %v2998 = vld [vmem:[#allocation8 + $0x4] sm:$0xf]
    %v2999 = vld [vmem:[#allocation8 + $0x8] sm:$0xf]
    %v3000 = vld [vmem:[#allocation8 + $0xc] sm:$0xf]
    %v3001 = vld [vmem:[#allocation8 + $0x10] sm:$0xf]
    %v3002 = vld [vmem:[#allocation8 + $0x14] sm:$0xf]
    %v3003 = vld [vmem:[#allocation8 + $0x18] sm:$0xf]
    %v3004 = vld [vmem:[#allocation8 + $0x1c] sm:$0xf]
    %v3005 = vld [vmem:[#allocation8 + $0x20] sm:$0xf]
    %v3006 = vld [vmem:[#allocation8 + $0x24] sm:$0xf]
    %v3007 = vld [vmem:[#allocation8 + $0x28] sm:$0xf]
    %v3008 = vld [vmem:[#allocation8 + $0x2c] sm:$0xf]
    %v3009 = vld [vmem:[#allocation8 + $0x30] sm:$0xf]
    %v3010 = vld [vmem:[#allocation8 + $0x34] sm:$0xf]
    %v3011 = vld [vmem:[#allocation8 + $0x38] sm:$0xf]
    %v3012 = vld [vmem:[#allocation8 + $0x3c] sm:$0xf]
    %v3013 = vlaneseq
    %v3014 = vshrl.u32 %v3013, 7
    %v3015 = vsub.s32 2, %v3014
    %v3016 = vrot.slane %v173, %v3015
    %v3033 = vunpack.c.l.b16 %v2997
    %v3034 = vunpack.c.l.b16 %v2998
    %v3035 = vunpack.c.l.b16 %v2999
    %v3036 = vunpack.c.l.b16 %v3000
    %v3037 = vunpack.c.l.b16 %v3001
    %v3038 = vunpack.c.l.b16 %v3002
    %v3039 = vunpack.c.l.b16 %v3003
    %v3040 = vunpack.c.l.b16 %v3004
    %v3041 = vunpack.c.l.b16 %v3005
    %v3042 = vunpack.c.l.b16 %v3006
    %v3043 = vunpack.c.l.b16 %v3007
    %v3044 = vunpack.c.l.b16 %v3008
    %v3045 = vunpack.c.l.b16 %v3009
    %v3046 = vunpack.c.l.b16 %v3010
    %v3047 = vunpack.c.l.b16 %v3011
    %v3048 = vunpack.c.l.b16 %v3012
    %v3049 = vpack.c.b16 %v3034, %v3033
    %v3050 = vpack.c.b16 %v3036, %v3035
    %v3051 = vpack.c.b16 %v3038, %v3037
    %v3052 = vpack.c.b16 %v3040, %v3039
    %v3053 = vpack.c.b16 %v3042, %v3041
    %v3054 = vpack.c.b16 %v3044, %v3043
    %v3055 = vpack.c.b16 %v3046, %v3045
    %v3056 = vpack.c.b16 %v3048, %v3047
    %3065 = vmatprep.subr.bf16.mxu0 0
    %3066 = vmatpush1.bf16.msra.mxu0 %v3049
    %3067 = vmatprep.subr.bf16.mxu0 0
    %3068 = vmatpush1.bf16.msra.mxu0 %v3050
    %3069 = vmatprep.subr.bf16.mxu0 0
    %3070 = vmatpush1.bf16.msra.mxu0 %v3051
    %3071 = vmatprep.subr.bf16.mxu0 0
    %3072 = vmatpush1.bf16.msra.mxu0 %v3052
    %3073 = vmatprep.subr.bf16.mxu0 0
    %3074 = vmatpush1.bf16.msra.mxu0 %v3053
    %3075 = vmatprep.subr.bf16.mxu0 0
    %3076 = vmatpush1.bf16.msra.mxu0 %v3054
    %3077 = vmatprep.subr.bf16.mxu0 0
    %3078 = vmatpush1.bf16.msra.mxu0 %v3055
    %3079 = vmatprep.subr.bf16.mxu0 0
    %3080 = vmatpush1.bf16.msra.mxu0 %v3056
    %3081 = vmatprep.subr.bf16.mxu0 0
    %3082 = vmatpush1.bf16.msra.mxu0 0
    %3083 = vmatprep.subr.bf16.mxu0 0
    %3084 = vmatpush1.bf16.msra.mxu0 0
    %3085 = vmatprep.subr.bf16.mxu0 0
    %3086 = vmatpush1.bf16.msra.mxu0 0
    %3087 = vmatprep.subr.bf16.mxu0 0
    %3088 = vmatpush1.bf16.msra.mxu0 0
    %3089 = vmatprep.subr.bf16.mxu0 0
    %3090 = vmatpush1.bf16.msra.mxu0 0
    %3091 = vmatprep.subr.bf16.mxu0 0
    %3092 = vmatpush1.bf16.msra.mxu0 0
    %3093 = vmatprep.subr.bf16.mxu0 0
    %3094 = vmatpush1.bf16.msra.mxu0 0
    %3095 = vmatprep.subr.bf16.mxu0 0
    %3096 = vmatpush1.bf16.msra.mxu0 0
    %3097 = vmatprep.mubr.bf16.mxu0 0
    %3098 = vmatmul.mubr.bf16.gmra.mrb[0].mxu0 %v2996
    %v3099 = vpop.f32.mrb[0].mxu0
    %v3100 = vadd.f32 %v3016, %v3099
    %v3101 = vpop.f32.mrb[0].mxu0
    %v3102 = vpop.f32.mrb[0].mxu0
    %v3103 = vadd.f32 %v3016, %v3102
    %v3104 = vpop.f32.mrb[0].mxu0
    %3105 = vdwg.mxu0
    %v3106 = vpack.c.bf16 %v3103, %v3100
    %v3108 = vunpack.c.l.b16 %v3106
    %v3109 = vunpack.c.h.b16 %v3106
    %v3110 = vpack.c.b16 %v3108, %v3108
    %v3111 = vpack.c.b16 %v3109, %v3109
    %3114 = vst [vmem:[#allocation10] sm:$0xf] %v3110
    %3115 = vst [vmem:[#allocation10 + $0x4] sm:$0xf] %v3111
    // Predicated region
    $region38: #{tpu_custom_call.1} parent=1 // pred_check
      _
    $region39: #{tpu_custom_call.1} parent=1 // pred_check_branch
      %3117 = sbr.rel (0) target = $region41
    $region40: #{tpu_custom_call.1} parent=1 // pred_region
      %s3119 = ssub.s32 128, 128
      %3120 = vsyncadd [#allocation4], %s3119
      %s3121 = sshll.u32 [#allocation10], 4
      %s3122 = int_to_ptr.vmem [resolvable:$true] %s3121
      %3127 = dma.vmem_to_hbm [thread:$0]  %s3122, 128, %s5, [#allocation4], 64, 64, 4
    $region41: #{tpu_custom_call.1} parent=1 // pred_fallthru
      _
    // Predicated region
    $region42: #{tpu_custom_call.1} parent=1 // pred_check
      _
    $region43: #{tpu_custom_call.1} parent=1 // pred_check_branch
      %3129 = sbr.rel (0) target = $region45
    $region44: #{tpu_custom_call.1} parent=1 // pred_region
      %3130 = dma.done [#allocation4], 128
    $region45: #{tpu_custom_call.1} parent=1 // pred_fallthru
      _
    %3131 = vsyncpa [#allocation3], 1
    %3132 = vsyncpa [#allocation6], 1
    %3133 = vsyncpa [#allocation9], 1
    %3134 = vsyncpa [#allocation4], 1

</llo_original>
